<compile_context>
chip_gen: v7x
topology: tpu7x:2x2x1
jax: 0.10.0
libtpu: 0.0.40
codegen_flags: <defaults>
</compile_context>

<pallas_src>
import numpy as np
import jax
import jax.numpy as jnp
from jax.experimental import pallas as pl
from jax.experimental.pallas import tpu as pltpu

# ----------------------------- model hyper-params ---------------------------
B = 2            # batch
L = 128          # input_dim (lane friendly)
C = 4            # n_out
N_CONV = 2       # n_conv
K1, K2 = 3, 9    # conv_width[0], conv_width[1] (branch_type='Linear' -> [2] unused)
H1, H2 = 64, 32  # branch hidden sizes
NOUT = 4         # 1 (mode) + 3 (nsubclones) fused output columns

CL = C * L       # 512  : flattened per-trunk feature width
W1F = 2 * H1     # 128  : fused hidden-1 width (mode + nsubclones)
W2F = 2 * H2     # 64   : fused hidden-2 width


# ------------------------------- kernel helpers -----------------------------
def _hardswish(x):
    return x * jnp.clip(x + 3.0, 0.0, 6.0) * (1.0 / 6.0)


# --------------------------------- kernel -----------------------------------
def evolution_kernel(x_ref,        # (B, L)                 f32
                     t0_ref,       # (L, 2*C*L)             bf16  layer-0 Toeplitz, both trunks
                     trest_ref,    # ((N_CONV-1)*2*C*L, C*L) bf16  layer>=1 Toeplitz blocks
                     cbias_ref,    # (N_CONV, 2*C*L)         f32   lane-broadcast conv biases
                     w1_ref,       # (C*L, 2*H1)             bf16  fused MLP layer 1
                     w23_ref,      # (2*H1 + 2*H2, 2*H2)     bf16  block-diag W2 (rows 0:128) + W3 (rows 128:192, cols 0:4)
                     mlpb_ref,     # (3, 2*H1)               f32   MLP bias rows (padded to 128 lanes)
                     out_ref):     # (B, NOUT)               f32
    bf16 = jnp.bfloat16
    f32 = jnp.float32

    # ---- conv layer 0: both trunks in one MXU dot ---------------------------
    x = x_ref[...]                                                  # (B, L)
    h = jnp.dot(x.astype(bf16), t0_ref[...],
                preferred_element_type=f32)                         # (B, 2*C*L)
    h = _hardswish(h + cbias_ref[0:1, :])

    # ---- conv layers 1 .. N_CONV-1: one dot per trunk -----------------------
    for layer in range(1, N_CONV):
        base = (layer - 1) * 2 * CL
        ha = jnp.dot(h[:, :CL].astype(bf16), trest_ref[base:base + CL, :],
                     preferred_element_type=f32)                    # (B, C*L)
        hb = jnp.dot(h[:, CL:].astype(bf16), trest_ref[base + CL:base + 2 * CL, :],
                     preferred_element_type=f32)                    # (B, C*L)
        h = jnp.concatenate([ha, hb], axis=1)                       # (B, 2*C*L)
        h = _hardswish(h + cbias_ref[layer:layer + 1, :])

    # ---- (2B, C*L) slab: rows [trunk-1 b0, b1, trunk-2 b0, b1] --------------
    # conv outputs are already flattened c*L + l along lanes (== nn.Flatten).
    slab = jnp.concatenate([h[:, :CL], h[:, CL:]], axis=0)          # (2B, C*L)

    # ---- fused branch MLPs ('mode' -> col 0, 'nsubclones' -> cols 1:4) ------
    g = jnp.dot(slab.astype(bf16), w1_ref[...],
                preferred_element_type=f32) + mlpb_ref[0:1, :W1F]
    g = _hardswish(g)                                               # (2B, 2*H1)
    g = jnp.dot(g.astype(bf16), w23_ref[0:W1F, :],
                preferred_element_type=f32) + mlpb_ref[1:2, :W2F]
    g = _hardswish(g)                                               # (2B, 2*H2)
    g = jnp.dot(g.astype(bf16), w23_ref[W1F:W1F + W2F, 0:NOUT],
                preferred_element_type=f32) + mlpb_ref[2:3, :NOUT]  # (2B, 4)

    # average trunk-1 / trunk-2 heads; single (B, 4) store
    out_ref[...] = 0.5 * (g[:B, :] + g[B:, :])


# ------------------------- host-side weight packing -------------------------
def _toeplitz(w, length):
    """'same'-padding Conv1d as a matrix.

    w : (C_out, C_in, K) f32
    returns T (C_in*length, C_out*length) with
        T[ci*length + i, co*length + j] = w[co, ci, k],  i = j + (k - K//2)
    so that  out_row = in_row @ T  reproduces the convolution (zero padding
    encoded by the band structure).
    """
    c_out, c_in, kk = w.shape
    pad = kk // 2
    t = np.zeros((c_in * length, c_out * length), np.float32)
    j = np.arange(length)
    for co in range(c_out):
        for ci in range(c_in):
            for k in range(kk):
                i = j + (k - pad)
                m = (i >= 0) & (i < length)
                t[ci * length + i[m], co * length + j[m]] = w[co, ci, k]
    return t


def evolution_forward(x, params):
    (w1_0, w1_r, cb1, w2_0, w2_r, cb2,
     mw1, mb1, mw2, mb2, mw3, mb3,
     nw1, nb1, nw2, nb2, nw3, nb3) = [np.asarray(p, np.float32) for p in params]

    # --- conv layer 0 (in_channels = 1), both trunks fused along output lanes
    t0 = np.concatenate([_toeplitz(w1_0[:, None, :], L),
                         _toeplitz(w2_0[:, None, :], L)], axis=1)    # (L, 2*C*L)

    # --- conv layers >= 1: (C*L, C*L) block per (layer, trunk), stacked on rows
    trest = np.concatenate(
        [np.concatenate([_toeplitz(w1_r[l], L), _toeplitz(w2_r[l], L)], axis=0)
         for l in range(N_CONV - 1)], axis=0)            # ((N_CONV-1)*2*C*L, C*L)

    # --- conv biases broadcast to lane layout co*L + l, trunk-1 then trunk-2
    cbias = np.stack([np.concatenate([np.repeat(cb1[l], L), np.repeat(cb2[l], L)])
                      for l in range(N_CONV)], axis=0)               # (N_CONV, 2*C*L)

    # --- fuse the two branch MLPs ('mode' -> 1, 'nsubclones' -> 3) -----------
    w1f = np.concatenate([mw1, nw1], axis=1)                         # (C*L, 2*H1)
    w2bd = np.zeros((2 * H1, 2 * H2), np.float32)
    w2bd[:H1, :H2] = mw2
    w2bd[H1:, H2:] = nw2
    w3bd = np.zeros((2 * H2, NOUT), np.float32)
    w3bd[:H2, 0:1] = mw3
    w3bd[H2:, 1:NOUT] = nw3
    w23 = np.zeros((2 * H1 + 2 * H2, 2 * H2), np.float32)            # (192, 64)
    w23[:2 * H1, :] = w2bd
    w23[2 * H1:, :NOUT] = w3bd

    mlpb = np.zeros((3, 2 * H1), np.float32)                         # (3, 128)
    mlpb[0, :] = np.concatenate([mb1, nb1])
    mlpb[1, :2 * H2] = np.concatenate([mb2, nb2])
    mlpb[2, :NOUT] = np.concatenate([mb3, nb3])

    def bf(a):
        return jnp.asarray(a).astype(jnp.bfloat16)

    vmem = pl.BlockSpec(memory_space=pltpu.MemorySpace.VMEM)

    out = pl.pallas_call(
        evolution_kernel,
        out_shape=jax.ShapeDtypeStruct((B, NOUT), jnp.float32),
        in_specs=[vmem] * 7,
        out_specs=vmem,
    )(jnp.asarray(x, jnp.float32), bf(t0), bf(trest), jnp.asarray(cbias),
      bf(w1f), bf(w23), jnp.asarray(mlpb))

    # module returns (t1.unsqueeze(1), t2) = ((B, 1), (B, 3))
    return out[:, 0:1], out[:, 1:NOUT]


# --------------------------- pure-numpy reference ---------------------------
def ref_forward_np(x, params):
    (w1_0, w1_r, cb1, w2_0, w2_r, cb2,
     mw1, mb1, mw2, mb2, mw3, mb3,
     nw1, nb1, nw2, nb2, nw3, nb3) = [np.asarray(p, np.float32) for p in params]
    x = np.asarray(x, np.float32)

    def hardswish(v):
        return v * np.clip(v + 3.0, 0.0, 6.0) * np.float32(1.0 / 6.0)

    def bf16(a):  # model the kernel's bf16 MXU operands (f32 accumulation)
        return np.asarray(jnp.asarray(np.asarray(a, np.float32),
                                      jnp.bfloat16).astype(jnp.float32))

    def conv1d_same(h, w, b):              # h (B,Cin,L), w (C,Cin,K), b (C,)
        hq, wq = bf16(h), bf16(w)          # bf16 operands, f32 accumulate
        K = w.shape[2]
        pad = K // 2
        hp = np.pad(hq, ((0, 0), (0, 0), (pad, pad)))
        out = np.zeros((h.shape[0], C, L), np.float32)
        for co in range(C):
            acc = np.full((h.shape[0], L), b[co], np.float32)
            for ci in range(h.shape[1]):
                for k in range(K):
                    acc = acc + wq[co, ci, k] * hp[:, ci, k:k + L]
            out[:, co, :] = acc
        return out

    def trunk(w0, wr, bias):               # -> (B, C, L)
        h = hardswish(conv1d_same(x[:, None, :], w0[:, None, :], bias[0]))
        for layer in range(1, N_CONV):
            h = hardswish(conv1d_same(h, wr[layer - 1], bias[layer]))
        return h

    def mlp(xf, w1, b1, w2, b2, w3, b3):
        h = hardswish(bf16(xf) @ bf16(w1) + b1)
        h = hardswish(bf16(h) @ bf16(w2) + b2)
        return bf16(h) @ bf16(w3) + b3

    def heads(xt):                         # xt (B, C, L)
        xf = xt.reshape(B, C * L)
        return (mlp(xf, mw1, mb1, mw2, mb2, mw3, mb3),   # (B, 1)  mode
                mlp(xf, nw1, nb1, nw2, nb2, nw3, nb3))   # (B, 3)  nsubclones

    t1a, t2a = heads(trunk(w1_0, w1_r, cb1))
    t1b, t2b = heads(trunk(w2_0, w2_r, cb2))
    return 0.5 * (t1a + t1b), 0.5 * (t2a + t2b)


# ----------------------------------- main ------------------------------------
if __name__ == "__main__":
    key = jax.random.PRNGKey(0)
    ks = jax.random.split(key, 19)

    x = jax.random.normal(ks[0], (B, L), jnp.float32)

    # trunk conv params (layer 0 has in_channels=1)
    w1_0 = 0.30 * jax.random.normal(ks[1], (C, K1), jnp.float32)
    w1_r = 0.20 * jax.random.normal(ks[2], (N_CONV - 1, C, C, K1), jnp.float32)
    cb1 = 0.10 * jax.random.normal(ks[3], (N_CONV, C), jnp.float32)
    w2_0 = 0.20 * jax.random.normal(ks[4], (C, K2), jnp.float32)
    w2_r = 0.15 * jax.random.normal(ks[5], (N_CONV - 1, C, C, K2), jnp.float32)
    cb2 = 0.10 * jax.random.normal(ks[6], (N_CONV, C), jnp.float32)

    # 'mode' branch: C*L -> 64 -> 32 -> 1
    mw1 = 0.05 * jax.random.normal(ks[7], (C * L, H1), jnp.float32)
    mb1 = 0.05 * jax.random.normal(ks[8], (H1,), jnp.float32)
    mw2 = 0.15 * jax.random.normal(ks[9], (H1, H2), jnp.float32)
    mb2 = 0.05 * jax.random.normal(ks[10], (H2,), jnp.float32)
    mw3 = 0.20 * jax.random.normal(ks[11], (H2, 1), jnp.float32)
    mb3 = 0.05 * jax.random.normal(ks[12], (1,), jnp.float32)

    # 'nsubclones' branch: C*L -> 64 -> 32 -> 3
    nw1 = 0.05 * jax.random.normal(ks[13], (C * L, H1), jnp.float32)
    nb1 = 0.05 * jax.random.normal(ks[14], (H1,), jnp.float32)
    nw2 = 0.15 * jax.random.normal(ks[15], (H1, H2), jnp.float32)
    nb2 = 0.05 * jax.random.normal(ks[16], (H2,), jnp.float32)
    nw3 = 0.20 * jax.random.normal(ks[17], (H2, 3), jnp.float32)
    nb3 = 0.05 * jax.random.normal(ks[18], (3,), jnp.float32)

    params = (w1_0, w1_r, cb1, w2_0, w2_r, cb2,
              mw1, mb1, mw2, mb2, mw3, mb3,
              nw1, nb1, nw2, nb2, nw3, nb3)

    t1, t2 = evolution_forward(x, params)
    jax.block_until_ready((t1, t2))

    r1, r2 = ref_forward_np(x, params)
    np.testing.assert_allclose(np.asarray(t1), r1, rtol=2e-3, atol=2e-3)
    np.testing.assert_allclose(np.asarray(t2), r2, rtol=2e-3, atol=2e-3)

    print("KERNEL_OK")
</pallas_src>

<mosaic_0001>
module attributes {stable_mosaic.version = 11 : i64} {
  func.func @evolution_kernel(%arg0: memref<2x128xf32, #tpu.memory_space<vmem>>, %arg1: memref<128x1024xbf16, #tpu.memory_space<vmem>>, %arg2: memref<1024x512xbf16, #tpu.memory_space<vmem>>, %arg3: memref<2x1024xf32, #tpu.memory_space<vmem>>, %arg4: memref<512x128xbf16, #tpu.memory_space<vmem>>, %arg5: memref<192x64xbf16, #tpu.memory_space<vmem>>, %arg6: memref<3x128xf32, #tpu.memory_space<vmem>>, %arg7: memref<2x4xf32, #tpu.memory_space<vmem>>) attributes {dimension_semantics = [], scalar_prefetch = 0 : i64, scratch_operands = 0 : i64, tpu.core_type = #tpu.core_type<tc>} {
    %c0 = arith.constant 0 : index
    %c0_0 = arith.constant 0 : index
    %0 = vector.load %arg0[%c0, %c0_0] : memref<2x128xf32, #tpu.memory_space<vmem>>, vector<2x128xf32>
    %1 = arith.truncf %0 : vector<2x128xf32> to vector<2x128xbf16>
    %c0_1 = arith.constant 0 : index
    %c0_2 = arith.constant 0 : index
    %2 = vector.load %arg1[%c0_1, %c0_2] : memref<128x1024xbf16, #tpu.memory_space<vmem>>, vector<128x1024xbf16>
    %cst = arith.constant dense<0.000000e+00> : vector<2x1024xf32>
    %3 = tpu.matmul %1, %2, %cst {dimension_numbers = #tpu.dot_dimension_numbers<[1], [0], [0], [1], [0, 0, 1, 1], [], []>} : vector<2x128xbf16>, vector<128x1024xbf16>, vector<2x1024xf32> -> vector<2x1024xf32>
    %c0_3 = arith.constant 0 : index
    %c0_4 = arith.constant 0 : index
    %4 = vector.load %arg3[%c0_3, %c0_4] : memref<2x1024xf32, #tpu.memory_space<vmem>>, vector<1x1024xf32>
    %5 = vector.broadcast %4 : vector<1x1024xf32> to vector<2x1024xf32>
    %6 = arith.addf %3, %5 : vector<2x1024xf32>
    %cst_5 = arith.constant 3.000000e+00 : f32
    %7 = vector.broadcast %cst_5 : f32 to vector<2x1024xf32>
    %8 = arith.addf %6, %7 : vector<2x1024xf32>
    %cst_6 = arith.constant 0.000000e+00 : f32
    %cst_7 = arith.constant 6.000000e+00 : f32
    %9 = vector.broadcast %cst_6 : f32 to vector<2x1024xf32>
    %10 = arith.maximumf %9, %8 : vector<2x1024xf32>
    %11 = vector.broadcast %cst_7 : f32 to vector<2x1024xf32>
    %12 = arith.minimumf %11, %10 : vector<2x1024xf32>
    %13 = arith.mulf %6, %12 : vector<2x1024xf32>
    %cst_8 = arith.constant 0.166666672 : f32
    %14 = vector.broadcast %cst_8 : f32 to vector<2x1024xf32>
    %15 = arith.mulf %13, %14 : vector<2x1024xf32>
    %16 = vector.extract_strided_slice %15 {offsets = [0, 0], sizes = [2, 512], strides = [1, 1]} : vector<2x1024xf32> to vector<2x512xf32>
    %17 = arith.truncf %16 : vector<2x512xf32> to vector<2x512xbf16>
    %c0_9 = arith.constant 0 : index
    %c0_10 = arith.constant 0 : index
    %18 = vector.load %arg2[%c0_9, %c0_10] : memref<1024x512xbf16, #tpu.memory_space<vmem>>, vector<512x512xbf16>
    %cst_11 = arith.constant dense<0.000000e+00> : vector<2x512xf32>
    %19 = tpu.matmul %17, %18, %cst_11 {dimension_numbers = #tpu.dot_dimension_numbers<[1], [0], [0], [1], [0, 0, 1, 1], [], []>} : vector<2x512xbf16>, vector<512x512xbf16>, vector<2x512xf32> -> vector<2x512xf32>
    %20 = vector.extract_strided_slice %15 {offsets = [0, 512], sizes = [2, 512], strides = [1, 1]} : vector<2x1024xf32> to vector<2x512xf32>
    %21 = arith.truncf %20 : vector<2x512xf32> to vector<2x512xbf16>
    %c512 = arith.constant 512 : index
    %c0_12 = arith.constant 0 : index
    %22 = vector.load %arg2[%c512, %c0_12] : memref<1024x512xbf16, #tpu.memory_space<vmem>>, vector<512x512xbf16>
    %cst_13 = arith.constant dense<0.000000e+00> : vector<2x512xf32>
    %23 = tpu.matmul %21, %22, %cst_13 {dimension_numbers = #tpu.dot_dimension_numbers<[1], [0], [0], [1], [0, 0, 1, 1], [], []>} : vector<2x512xbf16>, vector<512x512xbf16>, vector<2x512xf32> -> vector<2x512xf32>
    %24 = tpu.concatenate %19, %23 in 1 : vector<2x512xf32>, vector<2x512xf32> -> vector<2x1024xf32>
    %c1 = arith.constant 1 : index
    %c0_14 = arith.constant 0 : index
    %25 = vector.load %arg3[%c1, %c0_14] : memref<2x1024xf32, #tpu.memory_space<vmem>>, vector<1x1024xf32>
    %26 = vector.broadcast %25 : vector<1x1024xf32> to vector<2x1024xf32>
    %27 = arith.addf %24, %26 : vector<2x1024xf32>
    %cst_15 = arith.constant 3.000000e+00 : f32
    %28 = vector.broadcast %cst_15 : f32 to vector<2x1024xf32>
    %29 = arith.addf %27, %28 : vector<2x1024xf32>
    %cst_16 = arith.constant 0.000000e+00 : f32
    %cst_17 = arith.constant 6.000000e+00 : f32
    %30 = vector.broadcast %cst_16 : f32 to vector<2x1024xf32>
    %31 = arith.maximumf %30, %29 : vector<2x1024xf32>
    %32 = vector.broadcast %cst_17 : f32 to vector<2x1024xf32>
    %33 = arith.minimumf %32, %31 : vector<2x1024xf32>
    %34 = arith.mulf %27, %33 : vector<2x1024xf32>
    %cst_18 = arith.constant 0.166666672 : f32
    %35 = vector.broadcast %cst_18 : f32 to vector<2x1024xf32>
    %36 = arith.mulf %34, %35 : vector<2x1024xf32>
    %37 = vector.extract_strided_slice %36 {offsets = [0, 0], sizes = [2, 512], strides = [1, 1]} : vector<2x1024xf32> to vector<2x512xf32>
    %38 = vector.extract_strided_slice %36 {offsets = [0, 512], sizes = [2, 512], strides = [1, 1]} : vector<2x1024xf32> to vector<2x512xf32>
    %39 = tpu.concatenate %37, %38 in 0 : vector<2x512xf32>, vector<2x512xf32> -> vector<4x512xf32>
    %40 = arith.truncf %39 : vector<4x512xf32> to vector<4x512xbf16>
    %c0_19 = arith.constant 0 : index
    %c0_20 = arith.constant 0 : index
    %41 = vector.load %arg4[%c0_19, %c0_20] : memref<512x128xbf16, #tpu.memory_space<vmem>>, vector<512x128xbf16>
    %cst_21 = arith.constant dense<0.000000e+00> : vector<4x128xf32>
    %42 = tpu.matmul %40, %41, %cst_21 {dimension_numbers = #tpu.dot_dimension_numbers<[1], [0], [0], [1], [0, 0, 1, 1], [], []>} : vector<4x512xbf16>, vector<512x128xbf16>, vector<4x128xf32> -> vector<4x128xf32>
    %c0_22 = arith.constant 0 : index
    %c0_23 = arith.constant 0 : index
    %43 = vector.load %arg6[%c0_22, %c0_23] : memref<3x128xf32, #tpu.memory_space<vmem>>, vector<1x128xf32>
    %44 = vector.broadcast %43 : vector<1x128xf32> to vector<4x128xf32>
    %45 = arith.addf %42, %44 : vector<4x128xf32>
    %cst_24 = arith.constant 3.000000e+00 : f32
    %46 = vector.broadcast %cst_24 : f32 to vector<4x128xf32>
    %47 = arith.addf %45, %46 : vector<4x128xf32>
    %cst_25 = arith.constant 0.000000e+00 : f32
    %cst_26 = arith.constant 6.000000e+00 : f32
    %48 = vector.broadcast %cst_25 : f32 to vector<4x128xf32>
    %49 = arith.maximumf %48, %47 : vector<4x128xf32>
    %50 = vector.broadcast %cst_26 : f32 to vector<4x128xf32>
    %51 = arith.minimumf %50, %49 : vector<4x128xf32>
    %52 = arith.mulf %45, %51 : vector<4x128xf32>
    %cst_27 = arith.constant 0.166666672 : f32
    %53 = vector.broadcast %cst_27 : f32 to vector<4x128xf32>
    %54 = arith.mulf %52, %53 : vector<4x128xf32>
    %55 = arith.truncf %54 : vector<4x128xf32> to vector<4x128xbf16>
    %c0_28 = arith.constant 0 : index
    %c0_29 = arith.constant 0 : index
    %56 = vector.load %arg5[%c0_28, %c0_29] : memref<192x64xbf16, #tpu.memory_space<vmem>>, vector<128x64xbf16>
    %cst_30 = arith.constant dense<0.000000e+00> : vector<4x64xf32>
    %57 = tpu.matmul %55, %56, %cst_30 {dimension_numbers = #tpu.dot_dimension_numbers<[1], [0], [0], [1], [0, 0, 1, 1], [], []>} : vector<4x128xbf16>, vector<128x64xbf16>, vector<4x64xf32> -> vector<4x64xf32>
    %c1_31 = arith.constant 1 : index
    %c0_32 = arith.constant 0 : index
    %58 = vector.load %arg6[%c1_31, %c0_32] : memref<3x128xf32, #tpu.memory_space<vmem>>, vector<1x64xf32>
    %59 = vector.broadcast %58 : vector<1x64xf32> to vector<4x64xf32>
    %60 = arith.addf %57, %59 : vector<4x64xf32>
    %cst_33 = arith.constant 3.000000e+00 : f32
    %61 = vector.broadcast %cst_33 : f32 to vector<4x64xf32>
    %62 = arith.addf %60, %61 : vector<4x64xf32>
    %cst_34 = arith.constant 0.000000e+00 : f32
    %cst_35 = arith.constant 6.000000e+00 : f32
    %63 = vector.broadcast %cst_34 : f32 to vector<4x64xf32>
    %64 = arith.maximumf %63, %62 : vector<4x64xf32>
    %65 = vector.broadcast %cst_35 : f32 to vector<4x64xf32>
    %66 = arith.minimumf %65, %64 : vector<4x64xf32>
    %67 = arith.mulf %60, %66 : vector<4x64xf32>
    %cst_36 = arith.constant 0.166666672 : f32
    %68 = vector.broadcast %cst_36 : f32 to vector<4x64xf32>
    %69 = arith.mulf %67, %68 : vector<4x64xf32>
    %70 = arith.truncf %69 : vector<4x64xf32> to vector<4x64xbf16>
    %c128 = arith.constant 128 : index
    %c0_37 = arith.constant 0 : index
    %71 = vector.load %arg5[%c128, %c0_37] : memref<192x64xbf16, #tpu.memory_space<vmem>>, vector<64x4xbf16>
    %cst_38 = arith.constant dense<0.000000e+00> : vector<4x4xf32>
    %72 = tpu.matmul %70, %71, %cst_38 {dimension_numbers = #tpu.dot_dimension_numbers<[1], [0], [0], [1], [0, 0, 1, 1], [], []>} : vector<4x64xbf16>, vector<64x4xbf16>, vector<4x4xf32> -> vector<4x4xf32>
    %c2 = arith.constant 2 : index
    %c0_39 = arith.constant 0 : index
    %73 = vector.load %arg6[%c2, %c0_39] : memref<3x128xf32, #tpu.memory_space<vmem>>, vector<1x4xf32>
    %74 = vector.broadcast %73 : vector<1x4xf32> to vector<4x4xf32>
    %75 = arith.addf %72, %74 : vector<4x4xf32>
    %76 = vector.extract_strided_slice %75 {offsets = [0, 0], sizes = [2, 4], strides = [1, 1]} : vector<4x4xf32> to vector<2x4xf32>
    %77 = vector.extract_strided_slice %75 {offsets = [2, 0], sizes = [2, 4], strides = [1, 1]} : vector<4x4xf32> to vector<2x4xf32>
    %78 = arith.addf %76, %77 : vector<2x4xf32>
    %cst_40 = arith.constant 5.000000e-01 : f32
    %79 = vector.broadcast %cst_40 : f32 to vector<2x4xf32>
    %80 = arith.mulf %79, %78 : vector<2x4xf32>
    %c0_41 = arith.constant 0 : index
    %c0_42 = arith.constant 0 : index
    %81 = vector.load %arg7[%c0_41, %c0_42] : memref<2x4xf32, #tpu.memory_space<vmem>>, vector<2x4xf32>
    tpu.vector_store %arg7[%c0_41, %c0_42], %80 {strides = array<i32>} : memref<2x4xf32, #tpu.memory_space<vmem>>, vector<2x4xf32>,
    return
  }
}

</mosaic_0001>

<llo_original>
// kernel: tpu_custom_call.1
$region0: #{tpu_custom_call.1}
  #allocation0 [shape = 'u32[]', space=smem, size = 0x4, offset = 0x4, fixed_abs, tag = 'smem constant byte address 0x4 - core index']
  #allocation1 [shape = 'u32[144,128]{1,0:T(1,128)}', space=vmem, size = 0x12000, scoped, tag = 'internal scratch']
  %s0 = inlined_call_operand.vmem [shape: f32[2,128], index: 0, kind: input, shape index: {}]
  %s1 = inlined_call_operand.hbm [shape: bf16[128,1024], index: 1, kind: input, shape index: {}]
  %s2 = inlined_call_operand.hbm [shape: bf16[1024,512], index: 2, kind: input, shape index: {}]
  %s3 = inlined_call_operand.vmem [shape: f32[2,1024], index: 3, kind: input, shape index: {}]
  %s4 = inlined_call_operand.hbm [shape: bf16[512,128], index: 4, kind: input, shape index: {}]
  %s5 = inlined_call_operand.vmem [shape: bf16[192,64], index: 5, kind: input, shape index: {}]
  %s6 = inlined_call_operand.vmem [shape: f32[3,128], index: 6, kind: input, shape index: {}]
  %s7 = inlined_call_operand.hbm [shape: f32[2,4], index: 7, kind: output, shape index: {}]
  %s8 = sld [smem:[#allocation0]]
  $region50: #{tpu_custom_call.1} parent=0
    _
  %s10 = ssub.s32 1, %s8
  %s11 = scalar_select 0, %s10, %s8
  $region1: #{tpu_custom_call.1} parent=0
    #allocation2 [shape = 'u8[262144]{0}', space=vmem, size = 0x40000, scoped, tag = 'input window, operand 1, single buffered']
    #allocation3 [shape = 's32[1]{0}', space=sflag, size = 0x4, scoped, tag = 'scoped memory for tpu_custom_call.1']
    #allocation4 [shape = 's32[1]{0}', space=sflag, size = 0x4, scoped, tag = 'scoped memory for tpu_custom_call.1']
    #allocation5 [shape = 'u8[1048576]{0}', space=vmem, size = 0x100000, scoped, tag = 'input window, operand 2, single buffered']
    #allocation6 [shape = 's32[1]{0}', space=sflag, size = 0x4, scoped, tag = 'scoped memory for tpu_custom_call.1']
    #allocation7 [shape = 'u8[131072]{0}', space=vmem, size = 0x20000, scoped, tag = 'input window, operand 4, single buffered']
    #allocation8 [shape = 'u8[1024]{0}', space=vmem, size = 0x400, scoped, tag = 'output window, operand 0, single buffered']
    %12 = vsyncpa [#allocation3], 0
    %13 = vsyncpa [#allocation6], 0
    %14 = vsyncpa [#allocation4], 0
    // Predicated region
    $region2: #{tpu_custom_call.1} parent=1 // pred_check
      _
    $region3: #{tpu_custom_call.1} parent=1 // pred_check_branch
      %16 = sbr.rel (0) target = $region5
    $region4: #{tpu_custom_call.1} parent=1 // pred_region
      _
    $region5: #{tpu_custom_call.1} parent=1 // pred_fallthru
      _
    // Predicated region
    $region6: #{tpu_custom_call.1} parent=1 // pred_check
      _
    $region7: #{tpu_custom_call.1} parent=1 // pred_check_branch
      %18 = sbr.rel (0) target = $region9
    $region8: #{tpu_custom_call.1} parent=1 // pred_region
      %s20 = ssub.s32 8192, 8192
      %21 = vsyncadd [#allocation3], %s20
      %s22 = sshll.u32 [#allocation2], 4
      %s23 = int_to_ptr.vmem [resolvable:$true] %s22
      %28 = dma.hbm_to_vmem [thread:$0]  %s1, 8192, %s23, [#allocation3], 512, 512, 32
    $region9: #{tpu_custom_call.1} parent=1 // pred_fallthru
      _
    // Predicated region
    $region10: #{tpu_custom_call.1} parent=1 // pred_check
      _
    $region11: #{tpu_custom_call.1} parent=1 // pred_check_branch
      %30 = sbr.rel (0) target = $region13
    $region12: #{tpu_custom_call.1} parent=1 // pred_region
      %s32 = ssub.s32 32768, 32768
      %33 = vsyncadd [#allocation6], %s32
      %s34 = sshll.u32 [#allocation5], 4
      %s35 = int_to_ptr.vmem [resolvable:$true] %s34
      %40 = dma.hbm_to_vmem [thread:$0]  %s2, 32768, %s35, [#allocation6], 256, 256, 16
    $region13: #{tpu_custom_call.1} parent=1 // pred_fallthru
      _
    // Predicated region
    $region14: #{tpu_custom_call.1} parent=1 // pred_check
      _
    $region15: #{tpu_custom_call.1} parent=1 // pred_check_branch
      %42 = sbr.rel (0) target = $region17
    $region16: #{tpu_custom_call.1} parent=1 // pred_region
      _
    $region17: #{tpu_custom_call.1} parent=1 // pred_fallthru
      _
    // Predicated region
    $region18: #{tpu_custom_call.1} parent=1 // pred_check
      _
    $region19: #{tpu_custom_call.1} parent=1 // pred_check_branch
      %44 = sbr.rel (0) target = $region21
    $region20: #{tpu_custom_call.1} parent=1 // pred_region
      %s46 = ssub.s32 4096, 4096
      %47 = vsyncadd [#allocation6], %s46
      %s48 = sshll.u32 [#allocation7], 4
      %s49 = int_to_ptr.vmem [resolvable:$true] %s48
      %54 = dma.hbm_to_vmem [thread:$0]  %s4, 4096, %s49, [#allocation6], 64, 64, 4
    $region21: #{tpu_custom_call.1} parent=1 // pred_fallthru
      _
    // Predicated region
    $region22: #{tpu_custom_call.1} parent=1 // pred_check
      _
    $region23: #{tpu_custom_call.1} parent=1 // pred_check_branch
      %56 = sbr.rel (0) target = $region25
    $region24: #{tpu_custom_call.1} parent=1 // pred_region
      _
    $region25: #{tpu_custom_call.1} parent=1 // pred_fallthru
      _
    // Predicated region
    $region26: #{tpu_custom_call.1} parent=1 // pred_check
      _
    $region27: #{tpu_custom_call.1} parent=1 // pred_check_branch
      %58 = sbr.rel (0) target = $region29
    $region28: #{tpu_custom_call.1} parent=1 // pred_region
      _
    $region29: #{tpu_custom_call.1} parent=1 // pred_fallthru
      _
    // Predicated region
    $region30: #{tpu_custom_call.1} parent=1 // pred_check
      _
    $region31: #{tpu_custom_call.1} parent=1 // pred_check_branch
      %60 = sbr.rel (0) target = $region33
    $region32: #{tpu_custom_call.1} parent=1 // pred_region
      %61 = dma.done [#allocation3], 8192
    $region33: #{tpu_custom_call.1} parent=1 // pred_fallthru
      _
    // Predicated region
    $region34: #{tpu_custom_call.1} parent=1 // pred_check
      _
    $region35: #{tpu_custom_call.1} parent=1 // pred_check_branch
      %63 = sbr.rel (0) target = $region37
    $region36: #{tpu_custom_call.1} parent=1 // pred_region
      %64 = dma.done [#allocation6], 32768
    $region37: #{tpu_custom_call.1} parent=1 // pred_fallthru
      _
    // Predicated region
    $region38: #{tpu_custom_call.1} parent=1 // pred_check
      _
    $region39: #{tpu_custom_call.1} parent=1 // pred_check_branch
      %66 = sbr.rel (0) target = $region41
    $region40: #{tpu_custom_call.1} parent=1 // pred_region
      %67 = dma.done [#allocation6], 4096
    $region41: #{tpu_custom_call.1} parent=1 // pred_fallthru
      _
    %v69 = vld [vmem:[%s0] sm:$0x3]
    %v70 = vpack.c.bf16 %v69, %v69
    %v71 = vld [vmem:[#allocation2] sm:$0xff]
    %v72 = vld [vmem:[#allocation2 + $0x8] sm:$0xff]
    %v73 = vld [vmem:[#allocation2 + $0x10] sm:$0xff]
    %v74 = vld [vmem:[#allocation2 + $0x18] sm:$0xff]
    %v75 = vld [vmem:[#allocation2 + $0x20] sm:$0xff]
    %v76 = vld [vmem:[#allocation2 + $0x28] sm:$0xff]
    %v77 = vld [vmem:[#allocation2 + $0x30] sm:$0xff]
    %v78 = vld [vmem:[#allocation2 + $0x38] sm:$0xff]
    %v79 = vld [vmem:[#allocation2 + $0x40] sm:$0xff]
    %v80 = vld [vmem:[#allocation2 + $0x48] sm:$0xff]
    %v81 = vld [vmem:[#allocation2 + $0x50] sm:$0xff]
    %v82 = vld [vmem:[#allocation2 + $0x58] sm:$0xff]
    %v83 = vld [vmem:[#allocation2 + $0x60] sm:$0xff]
    %v84 = vld [vmem:[#allocation2 + $0x68] sm:$0xff]
    %v85 = vld [vmem:[#allocation2 + $0x70] sm:$0xff]
    %v86 = vld [vmem:[#allocation2 + $0x78] sm:$0xff]
    %v87 = vld [vmem:[#allocation2 + $0x80] sm:$0xff]
    %v88 = vld [vmem:[#allocation2 + $0x88] sm:$0xff]
    %v89 = vld [vmem:[#allocation2 + $0x90] sm:$0xff]
    %v90 = vld [vmem:[#allocation2 + $0x98] sm:$0xff]
    %v91 = vld [vmem:[#allocation2 + $0xa0] sm:$0xff]
    %v92 = vld [vmem:[#allocation2 + $0xa8] sm:$0xff]
    %v93 = vld [vmem:[#allocation2 + $0xb0] sm:$0xff]
    %v94 = vld [vmem:[#allocation2 + $0xb8] sm:$0xff]
    %v95 = vld [vmem:[#allocation2 + $0xc0] sm:$0xff]
    %v96 = vld [vmem:[#allocation2 + $0xc8] sm:$0xff]
    %v97 = vld [vmem:[#allocation2 + $0xd0] sm:$0xff]
    %v98 = vld [vmem:[#allocation2 + $0xd8] sm:$0xff]
    %v99 = vld [vmem:[#allocation2 + $0xe0] sm:$0xff]
    %v100 = vld [vmem:[#allocation2 + $0xe8] sm:$0xff]
    %v101 = vld [vmem:[#allocation2 + $0xf0] sm:$0xff]
    %v102 = vld [vmem:[#allocation2 + $0xf8] sm:$0xff]
    %v103 = vld [vmem:[#allocation2 + $0x100] sm:$0xff]
    %v104 = vld [vmem:[#allocation2 + $0x108] sm:$0xff]
    %v105 = vld [vmem:[#allocation2 + $0x110] sm:$0xff]
    %v106 = vld [vmem:[#allocation2 + $0x118] sm:$0xff]
    %v107 = vld [vmem:[#allocation2 + $0x120] sm:$0xff]
    %v108 = vld [vmem:[#allocation2 + $0x128] sm:$0xff]
    %v109 = vld [vmem:[#allocation2 + $0x130] sm:$0xff]
    %v110 = vld [vmem:[#allocation2 + $0x138] sm:$0xff]
    %v111 = vld [vmem:[#allocation2 + $0x140] sm:$0xff]
    %v112 = vld [vmem:[#allocation2 + $0x148] sm:$0xff]
    %v113 = vld [vmem:[#allocation2 + $0x150] sm:$0xff]
    %v114 = vld [vmem:[#allocation2 + $0x158] sm:$0xff]
    %v115 = vld [vmem:[#allocation2 + $0x160] sm:$0xff]
    %v116 = vld [vmem:[#allocation2 + $0x168] sm:$0xff]
    %v117 = vld [vmem:[#allocation2 + $0x170] sm:$0xff]
    %v118 = vld [vmem:[#allocation2 + $0x178] sm:$0xff]
    %v119 = vld [vmem:[#allocation2 + $0x180] sm:$0xff]
    %v120 = vld [vmem:[#allocation2 + $0x188] sm:$0xff]
    %v121 = vld [vmem:[#allocation2 + $0x190] sm:$0xff]
    %v122 = vld [vmem:[#allocation2 + $0x198] sm:$0xff]
    %v123 = vld [vmem:[#allocation2 + $0x1a0] sm:$0xff]
    %v124 = vld [vmem:[#allocation2 + $0x1a8] sm:$0xff]
    %v125 = vld [vmem:[#allocation2 + $0x1b0] sm:$0xff]
    %v126 = vld [vmem:[#allocation2 + $0x1b8] sm:$0xff]
    %v127 = vld [vmem:[#allocation2 + $0x1c0] sm:$0xff]
    %v128 = vld [vmem:[#allocation2 + $0x1c8] sm:$0xff]
    %v129 = vld [vmem:[#allocation2 + $0x1d0] sm:$0xff]
    %v130 = vld [vmem:[#allocation2 + $0x1d8] sm:$0xff]
    %v131 = vld [vmem:[#allocation2 + $0x1e0] sm:$0xff]
    %v132 = vld [vmem:[#allocation2 + $0x1e8] sm:$0xff]
    %v133 = vld [vmem:[#allocation2 + $0x1f0] sm:$0xff]
    %v134 = vld [vmem:[#allocation2 + $0x1f8] sm:$0xff]
    %v135 = vld [vmem:[%s3] ss:$2 sm:$0xff]
    %v137 = vlaneseq
    %v138 = vshrl.u32 %v137, 7
    %v139 = vsub.s32 0, %v138
    %v140 = vrot.slane %v135, %v139
    %v141 = vlaneseq
    %v142 = vshrl.u32 %v141, 7
    %v143 = vsub.s32 1, %v142
    %v144 = vrot.slane %v135, %v143
    %v145 = vlaneseq
    %v146 = vshrl.u32 %v145, 7
    %v147 = vsub.s32 2, %v146
    %v148 = vrot.slane %v135, %v147
    %v149 = vlaneseq
    %v150 = vshrl.u32 %v149, 7
    %v151 = vsub.s32 3, %v150
    %v152 = vrot.slane %v135, %v151
    %v153 = vlaneseq
    %v154 = vshrl.u32 %v153, 7
    %v155 = vsub.s32 4, %v154
    %v156 = vrot.slane %v135, %v155
    %v157 = vlaneseq
    %v158 = vshrl.u32 %v157, 7
    %v159 = vsub.s32 5, %v158
    %v160 = vrot.slane %v135, %v159
    %v161 = vlaneseq
    %v162 = vshrl.u32 %v161, 7
    %v163 = vsub.s32 6, %v162
    %v164 = vrot.slane %v135, %v163
    %v165 = vlaneseq
    %v166 = vshrl.u32 %v165, 7
    %v167 = vsub.s32 7, %v166
    %v168 = vrot.slane %v135, %v167
    %v241 = vunpack.c.l.b16 %v71
    %v242 = vunpack.c.h.b16 %v71
    %v243 = vunpack.c.l.b16 %v72
    %v244 = vunpack.c.h.b16 %v72
    %v245 = vunpack.c.l.b16 %v73
    %v246 = vunpack.c.h.b16 %v73
    %v247 = vunpack.c.l.b16 %v74
    %v248 = vunpack.c.h.b16 %v74
    %v249 = vunpack.c.l.b16 %v75
    %v250 = vunpack.c.h.b16 %v75
    %v251 = vunpack.c.l.b16 %v76
    %v252 = vunpack.c.h.b16 %v76
    %v253 = vunpack.c.l.b16 %v77
    %v254 = vunpack.c.h.b16 %v77
    %v255 = vunpack.c.l.b16 %v78
    %v256 = vunpack.c.h.b16 %v78
    %v257 = vunpack.c.l.b16 %v79
    %v258 = vunpack.c.h.b16 %v79
    %v259 = vunpack.c.l.b16 %v80
    %v260 = vunpack.c.h.b16 %v80
    %v261 = vunpack.c.l.b16 %v81
    %v262 = vunpack.c.h.b16 %v81
    %v263 = vunpack.c.l.b16 %v82
    %v264 = vunpack.c.h.b16 %v82
    %v265 = vunpack.c.l.b16 %v83
    %v266 = vunpack.c.h.b16 %v83
    %v267 = vunpack.c.l.b16 %v84
    %v268 = vunpack.c.h.b16 %v84
    %v269 = vunpack.c.l.b16 %v85
    %v270 = vunpack.c.h.b16 %v85
    %v271 = vunpack.c.l.b16 %v86
    %v272 = vunpack.c.h.b16 %v86
    %v273 = vunpack.c.l.b16 %v87
    %v274 = vunpack.c.h.b16 %v87
    %v275 = vunpack.c.l.b16 %v88
    %v276 = vunpack.c.h.b16 %v88
    %v277 = vunpack.c.l.b16 %v89
    %v278 = vunpack.c.h.b16 %v89
    %v279 = vunpack.c.l.b16 %v90
    %v280 = vunpack.c.h.b16 %v90
    %v281 = vunpack.c.l.b16 %v91
    %v282 = vunpack.c.h.b16 %v91
    %v283 = vunpack.c.l.b16 %v92
    %v284 = vunpack.c.h.b16 %v92
    %v285 = vunpack.c.l.b16 %v93
    %v286 = vunpack.c.h.b16 %v93
    %v287 = vunpack.c.l.b16 %v94
    %v288 = vunpack.c.h.b16 %v94
    %v289 = vunpack.c.l.b16 %v95
    %v290 = vunpack.c.h.b16 %v95
    %v291 = vunpack.c.l.b16 %v96
    %v292 = vunpack.c.h.b16 %v96
    %v293 = vunpack.c.l.b16 %v97
    %v294 = vunpack.c.h.b16 %v97
    %v295 = vunpack.c.l.b16 %v98
    %v296 = vunpack.c.h.b16 %v98
    %v297 = vunpack.c.l.b16 %v99
    %v298 = vunpack.c.h.b16 %v99
    %v299 = vunpack.c.l.b16 %v100
    %v300 = vunpack.c.h.b16 %v100
    %v301 = vunpack.c.l.b16 %v101
    %v302 = vunpack.c.h.b16 %v101
    %v303 = vunpack.c.l.b16 %v102
    %v304 = vunpack.c.h.b16 %v102
    %v305 = vunpack.c.l.b16 %v103
    %v306 = vunpack.c.h.b16 %v103
    %v307 = vunpack.c.l.b16 %v104
    %v308 = vunpack.c.h.b16 %v104
    %v309 = vunpack.c.l.b16 %v105
    %v310 = vunpack.c.h.b16 %v105
    %v311 = vunpack.c.l.b16 %v106
    %v312 = vunpack.c.h.b16 %v106
    %v313 = vunpack.c.l.b16 %v107
    %v314 = vunpack.c.h.b16 %v107
    %v315 = vunpack.c.l.b16 %v108
    %v316 = vunpack.c.h.b16 %v108
    %v317 = vunpack.c.l.b16 %v109
    %v318 = vunpack.c.h.b16 %v109
    %v319 = vunpack.c.l.b16 %v110
    %v320 = vunpack.c.h.b16 %v110
    %v321 = vunpack.c.l.b16 %v111
    %v322 = vunpack.c.h.b16 %v111
    %v323 = vunpack.c.l.b16 %v112
    %v324 = vunpack.c.h.b16 %v112
    %v325 = vunpack.c.l.b16 %v113
    %v326 = vunpack.c.h.b16 %v113
    %v327 = vunpack.c.l.b16 %v114
    %v328 = vunpack.c.h.b16 %v114
    %v329 = vunpack.c.l.b16 %v115
    %v330 = vunpack.c.h.b16 %v115
    %v331 = vunpack.c.l.b16 %v116
    %v332 = vunpack.c.h.b16 %v116
    %v333 = vunpack.c.l.b16 %v117
    %v334 = vunpack.c.h.b16 %v117
    %v335 = vunpack.c.l.b16 %v118
    %v336 = vunpack.c.h.b16 %v118
    %v337 = vunpack.c.l.b16 %v119
    %v338 = vunpack.c.h.b16 %v119
    %v339 = vunpack.c.l.b16 %v120
    %v340 = vunpack.c.h.b16 %v120
    %v341 = vunpack.c.l.b16 %v121
    %v342 = vunpack.c.h.b16 %v121
    %v343 = vunpack.c.l.b16 %v122
    %v344 = vunpack.c.h.b16 %v122
    %v345 = vunpack.c.l.b16 %v123
    %v346 = vunpack.c.h.b16 %v123
    %v347 = vunpack.c.l.b16 %v124
    %v348 = vunpack.c.h.b16 %v124
    %v349 = vunpack.c.l.b16 %v125
    %v350 = vunpack.c.h.b16 %v125
    %v351 = vunpack.c.l.b16 %v126
    %v352 = vunpack.c.h.b16 %v126
    %v353 = vunpack.c.l.b16 %v127
    %v354 = vunpack.c.h.b16 %v127
    %v355 = vunpack.c.l.b16 %v128
    %v356 = vunpack.c.h.b16 %v128
    %v357 = vunpack.c.l.b16 %v129
    %v358 = vunpack.c.h.b16 %v129
    %v359 = vunpack.c.l.b16 %v130
    %v360 = vunpack.c.h.b16 %v130
    %v361 = vunpack.c.l.b16 %v131
    %v362 = vunpack.c.h.b16 %v131
    %v363 = vunpack.c.l.b16 %v132
    %v364 = vunpack.c.h.b16 %v132
    %v365 = vunpack.c.l.b16 %v133
    %v366 = vunpack.c.h.b16 %v133
    %v367 = vunpack.c.l.b16 %v134
    %v368 = vunpack.c.h.b16 %v134
    %v369 = vpack.c.b16 %v249, %v241
    %v370 = vpack.c.b16 %v250, %v242
    %v371 = vpack.c.b16 %v251, %v243
    %v372 = vpack.c.b16 %v252, %v244
    %v373 = vpack.c.b16 %v253, %v245
    %v374 = vpack.c.b16 %v254, %v246
    %v375 = vpack.c.b16 %v255, %v247
    %v376 = vpack.c.b16 %v256, %v248
    %v377 = vpack.c.b16 %v265, %v257
    %v378 = vpack.c.b16 %v266, %v258
    %v379 = vpack.c.b16 %v267, %v259
    %v380 = vpack.c.b16 %v268, %v260
    %v381 = vpack.c.b16 %v269, %v261
    %v382 = vpack.c.b16 %v270, %v262
    %v383 = vpack.c.b16 %v271, %v263
    %v384 = vpack.c.b16 %v272, %v264
    %v385 = vpack.c.b16 %v281, %v273
    %v386 = vpack.c.b16 %v282, %v274
    %v387 = vpack.c.b16 %v283, %v275
    %v388 = vpack.c.b16 %v284, %v276
    %v389 = vpack.c.b16 %v285, %v277
    %v390 = vpack.c.b16 %v286, %v278
    %v391 = vpack.c.b16 %v287, %v279
    %v392 = vpack.c.b16 %v288, %v280
    %v393 = vpack.c.b16 %v297, %v289
    %v394 = vpack.c.b16 %v298, %v290
    %v395 = vpack.c.b16 %v299, %v291
    %v396 = vpack.c.b16 %v300, %v292
    %v397 = vpack.c.b16 %v301, %v293
    %v398 = vpack.c.b16 %v302, %v294
    %v399 = vpack.c.b16 %v303, %v295
    %v400 = vpack.c.b16 %v304, %v296
    %v401 = vpack.c.b16 %v313, %v305
    %v402 = vpack.c.b16 %v314, %v306
    %v403 = vpack.c.b16 %v315, %v307
    %v404 = vpack.c.b16 %v316, %v308
    %v405 = vpack.c.b16 %v317, %v309
    %v406 = vpack.c.b16 %v318, %v310
    %v407 = vpack.c.b16 %v319, %v311
    %v408 = vpack.c.b16 %v320, %v312
    %v409 = vpack.c.b16 %v329, %v321
    %v410 = vpack.c.b16 %v330, %v322
    %v411 = vpack.c.b16 %v331, %v323
    %v412 = vpack.c.b16 %v332, %v324
    %v413 = vpack.c.b16 %v333, %v325
    %v414 = vpack.c.b16 %v334, %v326
    %v415 = vpack.c.b16 %v335, %v327
    %v416 = vpack.c.b16 %v336, %v328
    %v417 = vpack.c.b16 %v345, %v337
    %v418 = vpack.c.b16 %v346, %v338
    %v419 = vpack.c.b16 %v347, %v339
    %v420 = vpack.c.b16 %v348, %v340
    %v421 = vpack.c.b16 %v349, %v341
    %v422 = vpack.c.b16 %v350, %v342
    %v423 = vpack.c.b16 %v351, %v343
    %v424 = vpack.c.b16 %v352, %v344
    %v425 = vpack.c.b16 %v361, %v353
    %v426 = vpack.c.b16 %v362, %v354
    %v427 = vpack.c.b16 %v363, %v355
    %v428 = vpack.c.b16 %v364, %v356
    %v429 = vpack.c.b16 %v365, %v357
    %v430 = vpack.c.b16 %v366, %v358
    %v431 = vpack.c.b16 %v367, %v359
    %v432 = vpack.c.b16 %v368, %v360
    %497 = vmatprep.subr.bf16.mxu0 %v370
    %498 = vmatpush1.bf16.msra.mxu0 %v369
    %499 = vmatprep.subr.bf16.mxu0 %v378
    %500 = vmatpush1.bf16.msra.mxu0 %v377
    %501 = vmatprep.subr.bf16.mxu0 %v386
    %502 = vmatpush1.bf16.msra.mxu0 %v385
    %503 = vmatprep.subr.bf16.mxu0 %v394
    %504 = vmatpush1.bf16.msra.mxu0 %v393
    %505 = vmatprep.subr.bf16.mxu0 %v402
    %506 = vmatpush1.bf16.msra.mxu0 %v401
    %507 = vmatprep.subr.bf16.mxu0 %v410
    %508 = vmatpush1.bf16.msra.mxu0 %v409
    %509 = vmatprep.subr.bf16.mxu0 %v418
    %510 = vmatpush1.bf16.msra.mxu0 %v417
    %511 = vmatprep.subr.bf16.mxu0 %v426
    %512 = vmatpush1.bf16.msra.mxu0 %v425
    %513 = vmatprep.subr.bf16.mxu0 0
    %514 = vmatpush1.bf16.msra.mxu0 0
    %515 = vmatprep.subr.bf16.mxu0 0
    %516 = vmatpush1.bf16.msra.mxu0 0
    %517 = vmatprep.subr.bf16.mxu0 0
    %518 = vmatpush1.bf16.msra.mxu0 0
    %519 = vmatprep.subr.bf16.mxu0 0
    %520 = vmatpush1.bf16.msra.mxu0 0
    %521 = vmatprep.subr.bf16.mxu0 0
    %522 = vmatpush1.bf16.msra.mxu0 0
    %523 = vmatprep.subr.bf16.mxu0 0
    %524 = vmatpush1.bf16.msra.mxu0 0
    %525 = vmatprep.subr.bf16.mxu0 0
    %526 = vmatpush1.bf16.msra.mxu0 0
    %527 = vmatprep.subr.bf16.mxu0 0
    %528 = vmatpush1.bf16.msra.mxu0 0
    %529 = vmatprep.mubr.bf16.mxu0 0
    %530 = vmatmul.mubr.bf16.gmra.mrb[0].mxu0 %v70
    %v531 = vpop.f32.mrb[0].mxu0
    %v532 = vadd.f32 %v140, %v531
    %v533 = vpop.f32.mrb[0].mxu0
    %v534 = vadd.f32 %v144, %v533
    %v535 = vpop.f32.mrb[0].mxu0
    %v536 = vpop.f32.mrb[0].mxu0
    %537 = vdwg.mxu0
    %538 = vmatprep.subr.bf16.mxu0 %v372
    %539 = vmatpush1.bf16.msra.mxu0 %v371
    %540 = vmatprep.subr.bf16.mxu0 %v380
    %541 = vmatpush1.bf16.msra.mxu0 %v379
    %542 = vmatprep.subr.bf16.mxu0 %v388
    %543 = vmatpush1.bf16.msra.mxu0 %v387
    %544 = vmatprep.subr.bf16.mxu0 %v396
    %545 = vmatpush1.bf16.msra.mxu0 %v395
    %546 = vmatprep.subr.bf16.mxu0 %v404
    %547 = vmatpush1.bf16.msra.mxu0 %v403
    %548 = vmatprep.subr.bf16.mxu0 %v412
    %549 = vmatpush1.bf16.msra.mxu0 %v411
    %550 = vmatprep.subr.bf16.mxu0 %v420
    %551 = vmatpush1.bf16.msra.mxu0 %v419
    %552 = vmatprep.subr.bf16.mxu0 %v428
    %553 = vmatpush1.bf16.msra.mxu0 %v427
    %554 = vmatprep.subr.bf16.mxu0 0
    %555 = vmatpush1.bf16.msra.mxu0 0
    %556 = vmatprep.subr.bf16.mxu0 0
    %557 = vmatpush1.bf16.msra.mxu0 0
    %558 = vmatprep.subr.bf16.mxu0 0
    %559 = vmatpush1.bf16.msra.mxu0 0
    %560 = vmatprep.subr.bf16.mxu0 0
    %561 = vmatpush1.bf16.msra.mxu0 0
    %562 = vmatprep.subr.bf16.mxu0 0
    %563 = vmatpush1.bf16.msra.mxu0 0
    %564 = vmatprep.subr.bf16.mxu0 0
    %565 = vmatpush1.bf16.msra.mxu0 0
    %566 = vmatprep.subr.bf16.mxu0 0
    %567 = vmatpush1.bf16.msra.mxu0 0
    %568 = vmatprep.subr.bf16.mxu0 0
    %569 = vmatpush1.bf16.msra.mxu0 0
    %570 = vmatprep.mubr.bf16.mxu0 0
    %571 = vmatmul.mubr.bf16.gmra.mrb[0].mxu0 %v70
    %v572 = vpop.f32.mrb[0].mxu0
    %v573 = vadd.f32 %v148, %v572
    %v574 = vpop.f32.mrb[0].mxu0
    %v575 = vadd.f32 %v152, %v574
    %v576 = vpop.f32.mrb[0].mxu0
    %v577 = vpop.f32.mrb[0].mxu0
    %578 = vdwg.mxu0
    %579 = vmatprep.subr.bf16.mxu0 %v374
    %580 = vmatpush1.bf16.msra.mxu0 %v373
    %581 = vmatprep.subr.bf16.mxu0 %v382
    %582 = vmatpush1.bf16.msra.mxu0 %v381
    %583 = vmatprep.subr.bf16.mxu0 %v390
    %584 = vmatpush1.bf16.msra.mxu0 %v389
    %585 = vmatprep.subr.bf16.mxu0 %v398
    %586 = vmatpush1.bf16.msra.mxu0 %v397
    %587 = vmatprep.subr.bf16.mxu0 %v406
    %588 = vmatpush1.bf16.msra.mxu0 %v405
    %589 = vmatprep.subr.bf16.mxu0 %v414
    %590 = vmatpush1.bf16.msra.mxu0 %v413
    %591 = vmatprep.subr.bf16.mxu0 %v422
    %592 = vmatpush1.bf16.msra.mxu0 %v421
    %593 = vmatprep.subr.bf16.mxu0 %v430
    %594 = vmatpush1.bf16.msra.mxu0 %v429
    %595 = vmatprep.subr.bf16.mxu0 0
    %596 = vmatpush1.bf16.msra.mxu0 0
    %597 = vmatprep.subr.bf16.mxu0 0
    %598 = vmatpush1.bf16.msra.mxu0 0
    %599 = vmatprep.subr.bf16.mxu0 0
    %600 = vmatpush1.bf16.msra.mxu0 0
    %601 = vmatprep.subr.bf16.mxu0 0
    %602 = vmatpush1.bf16.msra.mxu0 0
    %603 = vmatprep.subr.bf16.mxu0 0
    %604 = vmatpush1.bf16.msra.mxu0 0
    %605 = vmatprep.subr.bf16.mxu0 0
    %606 = vmatpush1.bf16.msra.mxu0 0
    %607 = vmatprep.subr.bf16.mxu0 0
    %608 = vmatpush1.bf16.msra.mxu0 0
    %609 = vmatprep.subr.bf16.mxu0 0
    %610 = vmatpush1.bf16.msra.mxu0 0
    %611 = vmatprep.mubr.bf16.mxu0 0
    %612 = vmatmul.mubr.bf16.gmra.mrb[0].mxu0 %v70
    %v613 = vpop.f32.mrb[0].mxu0
    %v614 = vadd.f32 %v156, %v613
    %v615 = vpop.f32.mrb[0].mxu0
    %v616 = vadd.f32 %v160, %v615
    %v617 = vpop.f32.mrb[0].mxu0
    %v618 = vpop.f32.mrb[0].mxu0
    %619 = vdwg.mxu0
    %620 = vmatprep.subr.bf16.mxu0 %v376
    %621 = vmatpush1.bf16.msra.mxu0 %v375
    %622 = vmatprep.subr.bf16.mxu0 %v384
    %623 = vmatpush1.bf16.msra.mxu0 %v383
    %624 = vmatprep.subr.bf16.mxu0 %v392
    %625 = vmatpush1.bf16.msra.mxu0 %v391
    %626 = vmatprep.subr.bf16.mxu0 %v400
    %627 = vmatpush1.bf16.msra.mxu0 %v399
    %628 = vmatprep.subr.bf16.mxu0 %v408
    %629 = vmatpush1.bf16.msra.mxu0 %v407
    %630 = vmatprep.subr.bf16.mxu0 %v416
    %631 = vmatpush1.bf16.msra.mxu0 %v415
    %632 = vmatprep.subr.bf16.mxu0 %v424
    %633 = vmatpush1.bf16.msra.mxu0 %v423
    %634 = vmatprep.subr.bf16.mxu0 %v432
    %635 = vmatpush1.bf16.msra.mxu0 %v431
    %636 = vmatprep.subr.bf16.mxu0 0
    %637 = vmatpush1.bf16.msra.mxu0 0
    %638 = vmatprep.subr.bf16.mxu0 0
    %639 = vmatpush1.bf16.msra.mxu0 0
    %640 = vmatprep.subr.bf16.mxu0 0
    %641 = vmatpush1.bf16.msra.mxu0 0
    %642 = vmatprep.subr.bf16.mxu0 0
    %643 = vmatpush1.bf16.msra.mxu0 0
    %644 = vmatprep.subr.bf16.mxu0 0
    %645 = vmatpush1.bf16.msra.mxu0 0
    %646 = vmatprep.subr.bf16.mxu0 0
    %647 = vmatpush1.bf16.msra.mxu0 0
    %648 = vmatprep.subr.bf16.mxu0 0
    %649 = vmatpush1.bf16.msra.mxu0 0
    %650 = vmatprep.subr.bf16.mxu0 0
    %651 = vmatpush1.bf16.msra.mxu0 0
    %652 = vmatprep.mubr.bf16.mxu0 0
    %653 = vmatmul.mubr.bf16.gmra.mrb[0].mxu0 %v70
    %v654 = vpop.f32.mrb[0].mxu0
    %v655 = vadd.f32 %v164, %v654
    %v656 = vpop.f32.mrb[0].mxu0
    %v657 = vadd.f32 %v168, %v656
    %v658 = vpop.f32.mrb[0].mxu0
    %v659 = vpop.f32.mrb[0].mxu0
    %660 = vdwg.mxu0
    %v661 = vadd.f32 %v532, 3.0
    %v662 = vadd.f32 %v534, 3.0
    %v663 = vadd.f32 %v573, 3.0
    %v664 = vadd.f32 %v575, 3.0
    %v665 = vadd.f32 %v614, 3.0
    %v666 = vadd.f32 %v616, 3.0
    %v667 = vadd.f32 %v655, 3.0
    %v668 = vadd.f32 %v657, 3.0
    %v669 = vmax.f32 %v661, 0.0
    %v670 = vmax.f32 %v662, 0.0
    %v671 = vmax.f32 %v663, 0.0
    %v672 = vmax.f32 %v664, 0.0
    %v673 = vmax.f32 %v665, 0.0
    %v674 = vmax.f32 %v666, 0.0
    %v675 = vmax.f32 %v667, 0.0
    %v676 = vmax.f32 %v668, 0.0
    %v677 = vmin.f32 %v669, 6.0
    %v678 = vmin.f32 %v670, 6.0
    %v679 = vmin.f32 %v671, 6.0
    %v680 = vmin.f32 %v672, 6.0
    %v681 = vmin.f32 %v673, 6.0
    %v682 = vmin.f32 %v674, 6.0
    %v683 = vmin.f32 %v675, 6.0
    %v684 = vmin.f32 %v676, 6.0
    %v685 = vmul.f32 %v532, %v677
    %v686 = vmul.f32 %v534, %v678
    %v687 = vmul.f32 %v573, %v679
    %v688 = vmul.f32 %v575, %v680
    %v689 = vmul.f32 %v614, %v681
    %v690 = vmul.f32 %v616, %v682
    %v691 = vmul.f32 %v655, %v683
    %v692 = vmul.f32 %v657, %v684
    %v693 = vmul.f32 %v685, 0.16666667
    %v694 = vmul.f32 %v686, 0.16666667
    %v695 = vmul.f32 %v687, 0.16666667
    %v696 = vmul.f32 %v688, 0.16666667
    %v697 = vmul.f32 %v689, 0.16666667
    %v698 = vmul.f32 %v690, 0.16666667
    %v699 = vmul.f32 %v691, 0.16666667
    %v700 = vmul.f32 %v692, 0.16666667
    %v701 = vpack.c.bf16 %v693, %v693
    %v702 = vpack.c.bf16 %v694, %v694
    %v703 = vpack.c.bf16 %v695, %v695
    %v704 = vpack.c.bf16 %v696, %v696
    %v705 = vld [vmem:[#allocation5] sm:$0xff]
    %v706 = vld [vmem:[#allocation5 + $0x8] sm:$0xff]
    %v707 = vld [vmem:[#allocation5 + $0x10] sm:$0xff]
    %v708 = vld [vmem:[#allocation5 + $0x18] sm:$0xff]
    %v709 = vld [vmem:[#allocation5 + $0x20] sm:$0xff]
    %v710 = vld [vmem:[#allocation5 + $0x28] sm:$0xff]
    %v711 = vld [vmem:[#allocation5 + $0x30] sm:$0xff]
    %v712 = vld [vmem:[#allocation5 + $0x38] sm:$0xff]
    %v713 = vld [vmem:[#allocation5 + $0x40] sm:$0xff]
    %v714 = vld [vmem:[#allocation5 + $0x48] sm:$0xff]
    %v715 = vld [vmem:[#allocation5 + $0x50] sm:$0xff]
    %v716 = vld [vmem:[#allocation5 + $0x58] sm:$0xff]
    %v717 = vld [vmem:[#allocation5 + $0x60] sm:$0xff]
    %v718 = vld [vmem:[#allocation5 + $0x68] sm:$0xff]
    %v719 = vld [vmem:[#allocation5 + $0x70] sm:$0xff]
    %v720 = vld [vmem:[#allocation5 + $0x78] sm:$0xff]
    %v721 = vld [vmem:[#allocation5 + $0x80] sm:$0xff]
    %v722 = vld [vmem:[#allocation5 + $0x88] sm:$0xff]
    %v723 = vld [vmem:[#allocation5 + $0x90] sm:$0xff]
    %v724 = vld [vmem:[#allocation5 + $0x98] sm:$0xff]
    %v725 = vld [vmem:[#allocation5 + $0xa0] sm:$0xff]
    %v726 = vld [vmem:[#allocation5 + $0xa8] sm:$0xff]
    %v727 = vld [vmem:[#allocation5 + $0xb0] sm:$0xff]
    %v728 = vld [vmem:[#allocation5 + $0xb8] sm:$0xff]
    %v729 = vld [vmem:[#allocation5 + $0xc0] sm:$0xff]
    %v730 = vld [vmem:[#allocation5 + $0xc8] sm:$0xff]
    %v731 = vld [vmem:[#allocation5 + $0xd0] sm:$0xff]
    %v732 = vld [vmem:[#allocation5 + $0xd8] sm:$0xff]
    %v733 = vld [vmem:[#allocation5 + $0xe0] sm:$0xff]
    %v734 = vld [vmem:[#allocation5 + $0xe8] sm:$0xff]
    %v735 = vld [vmem:[#allocation5 + $0xf0] sm:$0xff]
    %v736 = vld [vmem:[#allocation5 + $0xf8] sm:$0xff]
    %v737 = vld [vmem:[#allocation5 + $0x100] sm:$0xff]
    %v738 = vld [vmem:[#allocation5 + $0x108] sm:$0xff]
    %v739 = vld [vmem:[#allocation5 + $0x110] sm:$0xff]
    %v740 = vld [vmem:[#allocation5 + $0x118] sm:$0xff]
    %v741 = vld [vmem:[#allocation5 + $0x120] sm:$0xff]
    %v742 = vld [vmem:[#allocation5 + $0x128] sm:$0xff]
    %v743 = vld [vmem:[#allocation5 + $0x130] sm:$0xff]
    %v744 = vld [vmem:[#allocation5 + $0x138] sm:$0xff]
    %v745 = vld [vmem:[#allocation5 + $0x140] sm:$0xff]
    %v746 = vld [vmem:[#allocation5 + $0x148] sm:$0xff]
    %v747 = vld [vmem:[#allocation5 + $0x150] sm:$0xff]
    %v748 = vld [vmem:[#allocation5 + $0x158] sm:$0xff]
    %v749 = vld [vmem:[#allocation5 + $0x160] sm:$0xff]
    %v750 = vld [vmem:[#allocation5 + $0x168] sm:$0xff]
    %v751 = vld [vmem:[#allocation5 + $0x170] sm:$0xff]
    %v752 = vld [vmem:[#allocation5 + $0x178] sm:$0xff]
    %v753 = vld [vmem:[#allocation5 + $0x180] sm:$0xff]
    %v754 = vld [vmem:[#allocation5 + $0x188] sm:$0xff]
    %v755 = vld [vmem:[#allocation5 + $0x190] sm:$0xff]
    %v756 = vld [vmem:[#allocation5 + $0x198] sm:$0xff]
    %v757 = vld [vmem:[#allocation5 + $0x1a0] sm:$0xff]
    %v758 = vld [vmem:[#allocation5 + $0x1a8] sm:$0xff]
    %v759 = vld [vmem:[#allocation5 + $0x1b0] sm:$0xff]
    %v760 = vld [vmem:[#allocation5 + $0x1b8] sm:$0xff]
    %v761 = vld [vmem:[#allocation5 + $0x1c0] sm:$0xff]
    %v762 = vld [vmem:[#allocation5 + $0x1c8] sm:$0xff]
    %v763 = vld [vmem:[#allocation5 + $0x1d0] sm:$0xff]
    %v764 = vld [vmem:[#allocation5 + $0x1d8] sm:$0xff]
    %v765 = vld [vmem:[#allocation5 + $0x1e0] sm:$0xff]
    %v766 = vld [vmem:[#allocation5 + $0x1e8] sm:$0xff]
    %v767 = vld [vmem:[#allocation5 + $0x1f0] sm:$0xff]
    %v768 = vld [vmem:[#allocation5 + $0x1f8] sm:$0xff]
    %v769 = vld [vmem:[#allocation5 + $0x200] sm:$0xff]
    %v770 = vld [vmem:[#allocation5 + $0x208] sm:$0xff]
    %v771 = vld [vmem:[#allocation5 + $0x210] sm:$0xff]
    %v772 = vld [vmem:[#allocation5 + $0x218] sm:$0xff]
    %v773 = vld [vmem:[#allocation5 + $0x220] sm:$0xff]
    %v774 = vld [vmem:[#allocation5 + $0x228] sm:$0xff]
    %v775 = vld [vmem:[#allocation5 + $0x230] sm:$0xff]
    %v776 = vld [vmem:[#allocation5 + $0x238] sm:$0xff]
    %v777 = vld [vmem:[#allocation5 + $0x240] sm:$0xff]
    %v778 = vld [vmem:[#allocation5 + $0x248] sm:$0xff]
    %v779 = vld [vmem:[#allocation5 + $0x250] sm:$0xff]
    %v780 = vld [vmem:[#allocation5 + $0x258] sm:$0xff]
    %v781 = vld [vmem:[#allocation5 + $0x260] sm:$0xff]
    %v782 = vld [vmem:[#allocation5 + $0x268] sm:$0xff]
    %v783 = vld [vmem:[#allocation5 + $0x270] sm:$0xff]
    %v784 = vld [vmem:[#allocation5 + $0x278] sm:$0xff]
    %v785 = vld [vmem:[#allocation5 + $0x280] sm:$0xff]
    %v786 = vld [vmem:[#allocation5 + $0x288] sm:$0xff]
    %v787 = vld [vmem:[#allocation5 + $0x290] sm:$0xff]
    %v788 = vld [vmem:[#allocation5 + $0x298] sm:$0xff]
    %v789 = vld [vmem:[#allocation5 + $0x2a0] sm:$0xff]
    %v790 = vld [vmem:[#allocation5 + $0x2a8] sm:$0xff]
    %v791 = vld [vmem:[#allocation5 + $0x2b0] sm:$0xff]
    %v792 = vld [vmem:[#allocation5 + $0x2b8] sm:$0xff]
    %v793 = vld [vmem:[#allocation5 + $0x2c0] sm:$0xff]
    %v794 = vld [vmem:[#allocation5 + $0x2c8] sm:$0xff]
    %v795 = vld [vmem:[#allocation5 + $0x2d0] sm:$0xff]
    %v796 = vld [vmem:[#allocation5 + $0x2d8] sm:$0xff]
    %v797 = vld [vmem:[#allocation5 + $0x2e0] sm:$0xff]
    %v798 = vld [vmem:[#allocation5 + $0x2e8] sm:$0xff]
    %v799 = vld [vmem:[#allocation5 + $0x2f0] sm:$0xff]
    %v800 = vld [vmem:[#allocation5 + $0x2f8] sm:$0xff]
    %v801 = vld [vmem:[#allocation5 + $0x300] sm:$0xff]
    %v802 = vld [vmem:[#allocation5 + $0x308] sm:$0xff]
    %v803 = vld [vmem:[#allocation5 + $0x310] sm:$0xff]
    %v804 = vld [vmem:[#allocation5 + $0x318] sm:$0xff]
    %v805 = vld [vmem:[#allocation5 + $0x320] sm:$0xff]
    %v806 = vld [vmem:[#allocation5 + $0x328] sm:$0xff]
    %v807 = vld [vmem:[#allocation5 + $0x330] sm:$0xff]
    %v808 = vld [vmem:[#allocation5 + $0x338] sm:$0xff]
    %v809 = vld [vmem:[#allocation5 + $0x340] sm:$0xff]
    %v810 = vld [vmem:[#allocation5 + $0x348] sm:$0xff]
    %v811 = vld [vmem:[#allocation5 + $0x350] sm:$0xff]
    %v812 = vld [vmem:[#allocation5 + $0x358] sm:$0xff]
    %v813 = vld [vmem:[#allocation5 + $0x360] sm:$0xff]
    %v814 = vld [vmem:[#allocation5 + $0x368] sm:$0xff]
    %v815 = vld [vmem:[#allocation5 + $0x370] sm:$0xff]
    %v816 = vld [vmem:[#allocation5 + $0x378] sm:$0xff]
    %v817 = vld [vmem:[#allocation5 + $0x380] sm:$0xff]
    %v818 = vld [vmem:[#allocation5 + $0x388] sm:$0xff]
    %v819 = vld [vmem:[#allocation5 + $0x390] sm:$0xff]
    %v820 = vld [vmem:[#allocation5 + $0x398] sm:$0xff]
    %v821 = vld [vmem:[#allocation5 + $0x3a0] sm:$0xff]
    %v822 = vld [vmem:[#allocation5 + $0x3a8] sm:$0xff]
    %v823 = vld [vmem:[#allocation5 + $0x3b0] sm:$0xff]
    %v824 = vld [vmem:[#allocation5 + $0x3b8] sm:$0xff]
    %v825 = vld [vmem:[#allocation5 + $0x3c0] sm:$0xff]
    %v826 = vld [vmem:[#allocation5 + $0x3c8] sm:$0xff]
    %v827 = vld [vmem:[#allocation5 + $0x3d0] sm:$0xff]
    %v828 = vld [vmem:[#allocation5 + $0x3d8] sm:$0xff]
    %v829 = vld [vmem:[#allocation5 + $0x3e0] sm:$0xff]
    %v830 = vld [vmem:[#allocation5 + $0x3e8] sm:$0xff]
    %v831 = vld [vmem:[#allocation5 + $0x3f0] sm:$0xff]
    %v832 = vld [vmem:[#allocation5 + $0x3f8] sm:$0xff]
    %v961 = vunpack.c.l.b16 %v705
    %v962 = vunpack.c.h.b16 %v705
    %v963 = vunpack.c.l.b16 %v706
    %v964 = vunpack.c.h.b16 %v706
    %v965 = vunpack.c.l.b16 %v707
    %v966 = vunpack.c.h.b16 %v707
    %v967 = vunpack.c.l.b16 %v708
    %v968 = vunpack.c.h.b16 %v708
    %v969 = vunpack.c.l.b16 %v709
    %v970 = vunpack.c.h.b16 %v709
    %v971 = vunpack.c.l.b16 %v710
    %v972 = vunpack.c.h.b16 %v710
    %v973 = vunpack.c.l.b16 %v711
    %v974 = vunpack.c.h.b16 %v711
    %v975 = vunpack.c.l.b16 %v712
    %v976 = vunpack.c.h.b16 %v712
    %v977 = vunpack.c.l.b16 %v713
    %v978 = vunpack.c.h.b16 %v713
    %v979 = vunpack.c.l.b16 %v714
    %v980 = vunpack.c.h.b16 %v714
    %v981 = vunpack.c.l.b16 %v715
    %v982 = vunpack.c.h.b16 %v715
    %v983 = vunpack.c.l.b16 %v716
    %v984 = vunpack.c.h.b16 %v716
    %v985 = vunpack.c.l.b16 %v717
    %v986 = vunpack.c.h.b16 %v717
    %v987 = vunpack.c.l.b16 %v718
    %v988 = vunpack.c.h.b16 %v718
    %v989 = vunpack.c.l.b16 %v719
    %v990 = vunpack.c.h.b16 %v719
    %v991 = vunpack.c.l.b16 %v720
    %v992 = vunpack.c.h.b16 %v720
    %v993 = vunpack.c.l.b16 %v721
    %v994 = vunpack.c.h.b16 %v721
    %v995 = vunpack.c.l.b16 %v722
    %v996 = vunpack.c.h.b16 %v722
    %v997 = vunpack.c.l.b16 %v723
    %v998 = vunpack.c.h.b16 %v723
    %v999 = vunpack.c.l.b16 %v724
    %v1000 = vunpack.c.h.b16 %v724
    %v1001 = vunpack.c.l.b16 %v725
    %v1002 = vunpack.c.h.b16 %v725
    %v1003 = vunpack.c.l.b16 %v726
    %v1004 = vunpack.c.h.b16 %v726
    %v1005 = vunpack.c.l.b16 %v727
    %v1006 = vunpack.c.h.b16 %v727
    %v1007 = vunpack.c.l.b16 %v728
    %v1008 = vunpack.c.h.b16 %v728
    %v1009 = vunpack.c.l.b16 %v729
    %v1010 = vunpack.c.h.b16 %v729
    %v1011 = vunpack.c.l.b16 %v730
    %v1012 = vunpack.c.h.b16 %v730
    %v1013 = vunpack.c.l.b16 %v731
    %v1014 = vunpack.c.h.b16 %v731
    %v1015 = vunpack.c.l.b16 %v732
    %v1016 = vunpack.c.h.b16 %v732
    %v1017 = vunpack.c.l.b16 %v733
    %v1018 = vunpack.c.h.b16 %v733
    %v1019 = vunpack.c.l.b16 %v734
    %v1020 = vunpack.c.h.b16 %v734
    %v1021 = vunpack.c.l.b16 %v735
    %v1022 = vunpack.c.h.b16 %v735
    %v1023 = vunpack.c.l.b16 %v736
    %v1024 = vunpack.c.h.b16 %v736
    %v1025 = vunpack.c.l.b16 %v737
    %v1026 = vunpack.c.h.b16 %v737
    %v1027 = vunpack.c.l.b16 %v738
    %v1028 = vunpack.c.h.b16 %v738
    %v1029 = vunpack.c.l.b16 %v739
    %v1030 = vunpack.c.h.b16 %v739
    %v1031 = vunpack.c.l.b16 %v740
    %v1032 = vunpack.c.h.b16 %v740
    %v1033 = vunpack.c.l.b16 %v741
    %v1034 = vunpack.c.h.b16 %v741
    %v1035 = vunpack.c.l.b16 %v742
    %v1036 = vunpack.c.h.b16 %v742
    %v1037 = vunpack.c.l.b16 %v743
    %v1038 = vunpack.c.h.b16 %v743
    %v1039 = vunpack.c.l.b16 %v744
    %v1040 = vunpack.c.h.b16 %v744
    %v1041 = vunpack.c.l.b16 %v745
    %v1042 = vunpack.c.h.b16 %v745
    %v1043 = vunpack.c.l.b16 %v746
    %v1044 = vunpack.c.h.b16 %v746
    %v1045 = vunpack.c.l.b16 %v747
    %v1046 = vunpack.c.h.b16 %v747
    %v1047 = vunpack.c.l.b16 %v748
    %v1048 = vunpack.c.h.b16 %v748
    %v1049 = vunpack.c.l.b16 %v749
    %v1050 = vunpack.c.h.b16 %v749
    %v1051 = vunpack.c.l.b16 %v750
    %v1052 = vunpack.c.h.b16 %v750
    %v1053 = vunpack.c.l.b16 %v751
    %v1054 = vunpack.c.h.b16 %v751
    %v1055 = vunpack.c.l.b16 %v752
    %v1056 = vunpack.c.h.b16 %v752
    %v1057 = vunpack.c.l.b16 %v753
    %v1058 = vunpack.c.h.b16 %v753
    %v1059 = vunpack.c.l.b16 %v754
    %v1060 = vunpack.c.h.b16 %v754
    %v1061 = vunpack.c.l.b16 %v755
    %v1062 = vunpack.c.h.b16 %v755
    %v1063 = vunpack.c.l.b16 %v756
    %v1064 = vunpack.c.h.b16 %v756
    %v1065 = vunpack.c.l.b16 %v757
    %v1066 = vunpack.c.h.b16 %v757
    %v1067 = vunpack.c.l.b16 %v758
    %v1068 = vunpack.c.h.b16 %v758
    %v1069 = vunpack.c.l.b16 %v759
    %v1070 = vunpack.c.h.b16 %v759
    %v1071 = vunpack.c.l.b16 %v760
    %v1072 = vunpack.c.h.b16 %v760
    %v1073 = vunpack.c.l.b16 %v761
    %v1074 = vunpack.c.h.b16 %v761
    %v1075 = vunpack.c.l.b16 %v762
    %v1076 = vunpack.c.h.b16 %v762
    %v1077 = vunpack.c.l.b16 %v763
    %v1078 = vunpack.c.h.b16 %v763
    %v1079 = vunpack.c.l.b16 %v764
    %v1080 = vunpack.c.h.b16 %v764
    %v1081 = vunpack.c.l.b16 %v765
    %v1082 = vunpack.c.h.b16 %v765
    %v1083 = vunpack.c.l.b16 %v766
    %v1084 = vunpack.c.h.b16 %v766
    %v1085 = vunpack.c.l.b16 %v767
    %v1086 = vunpack.c.h.b16 %v767
    %v1087 = vunpack.c.l.b16 %v768
    %v1088 = vunpack.c.h.b16 %v768
    %v1089 = vunpack.c.l.b16 %v769
    %v1090 = vunpack.c.h.b16 %v769
    %v1091 = vunpack.c.l.b16 %v770
    %v1092 = vunpack.c.h.b16 %v770
    %v1093 = vunpack.c.l.b16 %v771
    %v1094 = vunpack.c.h.b16 %v771
    %v1095 = vunpack.c.l.b16 %v772
    %v1096 = vunpack.c.h.b16 %v772
    %v1097 = vunpack.c.l.b16 %v773
    %v1098 = vunpack.c.h.b16 %v773
    %v1099 = vunpack.c.l.b16 %v774
    %v1100 = vunpack.c.h.b16 %v774
    %v1101 = vunpack.c.l.b16 %v775
    %v1102 = vunpack.c.h.b16 %v775
    %v1103 = vunpack.c.l.b16 %v776
    %v1104 = vunpack.c.h.b16 %v776
    %v1105 = vunpack.c.l.b16 %v777
    %v1106 = vunpack.c.h.b16 %v777
    %v1107 = vunpack.c.l.b16 %v778
    %v1108 = vunpack.c.h.b16 %v778
    %v1109 = vunpack.c.l.b16 %v779
    %v1110 = vunpack.c.h.b16 %v779
    %v1111 = vunpack.c.l.b16 %v780
    %v1112 = vunpack.c.h.b16 %v780
    %v1113 = vunpack.c.l.b16 %v781
    %v1114 = vunpack.c.h.b16 %v781
    %v1115 = vunpack.c.l.b16 %v782
    %v1116 = vunpack.c.h.b16 %v782
    %v1117 = vunpack.c.l.b16 %v783
    %v1118 = vunpack.c.h.b16 %v783
    %v1119 = vunpack.c.l.b16 %v784
    %v1120 = vunpack.c.h.b16 %v784
    %v1121 = vunpack.c.l.b16 %v785
    %v1122 = vunpack.c.h.b16 %v785
    %v1123 = vunpack.c.l.b16 %v786
    %v1124 = vunpack.c.h.b16 %v786
    %v1125 = vunpack.c.l.b16 %v787
    %v1126 = vunpack.c.h.b16 %v787
    %v1127 = vunpack.c.l.b16 %v788
    %v1128 = vunpack.c.h.b16 %v788
    %v1129 = vunpack.c.l.b16 %v789
    %v1130 = vunpack.c.h.b16 %v789
    %v1131 = vunpack.c.l.b16 %v790
    %v1132 = vunpack.c.h.b16 %v790
    %v1133 = vunpack.c.l.b16 %v791
    %v1134 = vunpack.c.h.b16 %v791
    %v1135 = vunpack.c.l.b16 %v792
    %v1136 = vunpack.c.h.b16 %v792
    %v1137 = vunpack.c.l.b16 %v793
    %v1138 = vunpack.c.h.b16 %v793
    %v1139 = vunpack.c.l.b16 %v794
    %v1140 = vunpack.c.h.b16 %v794
    %v1141 = vunpack.c.l.b16 %v795
    %v1142 = vunpack.c.h.b16 %v795
    %v1143 = vunpack.c.l.b16 %v796
    %v1144 = vunpack.c.h.b16 %v796
    %v1145 = vunpack.c.l.b16 %v797
    %v1146 = vunpack.c.h.b16 %v797
    %v1147 = vunpack.c.l.b16 %v798
    %v1148 = vunpack.c.h.b16 %v798
    %v1149 = vunpack.c.l.b16 %v799
    %v1150 = vunpack.c.h.b16 %v799
    %v1151 = vunpack.c.l.b16 %v800
    %v1152 = vunpack.c.h.b16 %v800
    %v1153 = vunpack.c.l.b16 %v801
    %v1154 = vunpack.c.h.b16 %v801
    %v1155 = vunpack.c.l.b16 %v802
    %v1156 = vunpack.c.h.b16 %v802
    %v1157 = vunpack.c.l.b16 %v803
    %v1158 = vunpack.c.h.b16 %v803
    %v1159 = vunpack.c.l.b16 %v804
    %v1160 = vunpack.c.h.b16 %v804
    %v1161 = vunpack.c.l.b16 %v805
    %v1162 = vunpack.c.h.b16 %v805
    %v1163 = vunpack.c.l.b16 %v806
    %v1164 = vunpack.c.h.b16 %v806
    %v1165 = vunpack.c.l.b16 %v807
    %v1166 = vunpack.c.h.b16 %v807
    %v1167 = vunpack.c.l.b16 %v808
    %v1168 = vunpack.c.h.b16 %v808
    %v1169 = vunpack.c.l.b16 %v809
    %v1170 = vunpack.c.h.b16 %v809
    %v1171 = vunpack.c.l.b16 %v810
    %v1172 = vunpack.c.h.b16 %v810
    %v1173 = vunpack.c.l.b16 %v811
    %v1174 = vunpack.c.h.b16 %v811
    %v1175 = vunpack.c.l.b16 %v812
    %v1176 = vunpack.c.h.b16 %v812
    %v1177 = vunpack.c.l.b16 %v813
    %v1178 = vunpack.c.h.b16 %v813
    %v1179 = vunpack.c.l.b16 %v814
    %v1180 = vunpack.c.h.b16 %v814
    %v1181 = vunpack.c.l.b16 %v815
    %v1182 = vunpack.c.h.b16 %v815
    %v1183 = vunpack.c.l.b16 %v816
    %v1184 = vunpack.c.h.b16 %v816
    %v1185 = vunpack.c.l.b16 %v817
    %v1186 = vunpack.c.h.b16 %v817
    %v1187 = vunpack.c.l.b16 %v818
    %v1188 = vunpack.c.h.b16 %v818
    %v1189 = vunpack.c.l.b16 %v819
    %v1190 = vunpack.c.h.b16 %v819
    %v1191 = vunpack.c.l.b16 %v820
    %v1192 = vunpack.c.h.b16 %v820
    %v1193 = vunpack.c.l.b16 %v821
    %v1194 = vunpack.c.h.b16 %v821
    %v1195 = vunpack.c.l.b16 %v822
    %v1196 = vunpack.c.h.b16 %v822
    %v1197 = vunpack.c.l.b16 %v823
    %v1198 = vunpack.c.h.b16 %v823
    %v1199 = vunpack.c.l.b16 %v824
    %v1200 = vunpack.c.h.b16 %v824
    %v1201 = vunpack.c.l.b16 %v825
    %v1202 = vunpack.c.h.b16 %v825
    %v1203 = vunpack.c.l.b16 %v826
    %v1204 = vunpack.c.h.b16 %v826
    %v1205 = vunpack.c.l.b16 %v827
    %v1206 = vunpack.c.h.b16 %v827
    %v1207 = vunpack.c.l.b16 %v828
    %v1208 = vunpack.c.h.b16 %v828
    %v1209 = vunpack.c.l.b16 %v829
    %v1210 = vunpack.c.h.b16 %v829
    %v1211 = vunpack.c.l.b16 %v830
    %v1212 = vunpack.c.h.b16 %v830
    %v1213 = vunpack.c.l.b16 %v831
    %v1214 = vunpack.c.h.b16 %v831
    %v1215 = vunpack.c.l.b16 %v832
    %v1216 = vunpack.c.h.b16 %v832
    %v1217 = vpack.c.b16 %v965, %v961
    %v1218 = vpack.c.b16 %v966, %v962
    %v1219 = vpack.c.b16 %v967, %v963
    %v1220 = vpack.c.b16 %v968, %v964
    %v1221 = vpack.c.b16 %v973, %v969
    %v1222 = vpack.c.b16 %v974, %v970
    %v1223 = vpack.c.b16 %v975, %v971
    %v1224 = vpack.c.b16 %v976, %v972
    %v1225 = vpack.c.b16 %v981, %v977
    %v1226 = vpack.c.b16 %v982, %v978
    %v1227 = vpack.c.b16 %v983, %v979
    %v1228 = vpack.c.b16 %v984, %v980
    %v1229 = vpack.c.b16 %v989, %v985
    %v1230 = vpack.c.b16 %v990, %v986
    %v1231 = vpack.c.b16 %v991, %v987
    %v1232 = vpack.c.b16 %v992, %v988
    %v1233 = vpack.c.b16 %v997, %v993
    %v1234 = vpack.c.b16 %v998, %v994
    %v1235 = vpack.c.b16 %v999, %v995
    %v1236 = vpack.c.b16 %v1000, %v996
    %v1237 = vpack.c.b16 %v1005, %v1001
    %v1238 = vpack.c.b16 %v1006, %v1002
    %v1239 = vpack.c.b16 %v1007, %v1003
    %v1240 = vpack.c.b16 %v1008, %v1004
    %v1241 = vpack.c.b16 %v1013, %v1009
    %v1242 = vpack.c.b16 %v1014, %v1010
    %v1243 = vpack.c.b16 %v1015, %v1011
    %v1244 = vpack.c.b16 %v1016, %v1012
    %v1245 = vpack.c.b16 %v1021, %v1017
    %v1246 = vpack.c.b16 %v1022, %v1018
    %v1247 = vpack.c.b16 %v1023, %v1019
    %v1248 = vpack.c.b16 %v1024, %v1020
    %v1249 = vpack.c.b16 %v1029, %v1025
    %v1250 = vpack.c.b16 %v1030, %v1026
    %v1251 = vpack.c.b16 %v1031, %v1027
    %v1252 = vpack.c.b16 %v1032, %v1028
    %v1253 = vpack.c.b16 %v1037, %v1033
    %v1254 = vpack.c.b16 %v1038, %v1034
    %v1255 = vpack.c.b16 %v1039, %v1035
    %v1256 = vpack.c.b16 %v1040, %v1036
    %v1257 = vpack.c.b16 %v1045, %v1041
    %v1258 = vpack.c.b16 %v1046, %v1042
    %v1259 = vpack.c.b16 %v1047, %v1043
    %v1260 = vpack.c.b16 %v1048, %v1044
    %v1261 = vpack.c.b16 %v1053, %v1049
    %v1262 = vpack.c.b16 %v1054, %v1050
    %v1263 = vpack.c.b16 %v1055, %v1051
    %v1264 = vpack.c.b16 %v1056, %v1052
    %v1265 = vpack.c.b16 %v1061, %v1057
    %v1266 = vpack.c.b16 %v1062, %v1058
    %v1267 = vpack.c.b16 %v1063, %v1059
    %v1268 = vpack.c.b16 %v1064, %v1060
    %v1269 = vpack.c.b16 %v1069, %v1065
    %v1270 = vpack.c.b16 %v1070, %v1066
    %v1271 = vpack.c.b16 %v1071, %v1067
    %v1272 = vpack.c.b16 %v1072, %v1068
    %v1273 = vpack.c.b16 %v1077, %v1073
    %v1274 = vpack.c.b16 %v1078, %v1074
    %v1275 = vpack.c.b16 %v1079, %v1075
    %v1276 = vpack.c.b16 %v1080, %v1076
    %v1277 = vpack.c.b16 %v1085, %v1081
    %v1278 = vpack.c.b16 %v1086, %v1082
    %v1279 = vpack.c.b16 %v1087, %v1083
    %v1280 = vpack.c.b16 %v1088, %v1084
    %v1281 = vpack.c.b16 %v1093, %v1089
    %v1282 = vpack.c.b16 %v1094, %v1090
    %v1283 = vpack.c.b16 %v1095, %v1091
    %v1284 = vpack.c.b16 %v1096, %v1092
    %v1285 = vpack.c.b16 %v1101, %v1097
    %v1286 = vpack.c.b16 %v1102, %v1098
    %v1287 = vpack.c.b16 %v1103, %v1099
    %v1288 = vpack.c.b16 %v1104, %v1100
    %v1289 = vpack.c.b16 %v1109, %v1105
    %v1290 = vpack.c.b16 %v1110, %v1106
    %v1291 = vpack.c.b16 %v1111, %v1107
    %v1292 = vpack.c.b16 %v1112, %v1108
    %v1293 = vpack.c.b16 %v1117, %v1113
    %v1294 = vpack.c.b16 %v1118, %v1114
    %v1295 = vpack.c.b16 %v1119, %v1115
    %v1296 = vpack.c.b16 %v1120, %v1116
    %v1297 = vpack.c.b16 %v1125, %v1121
    %v1298 = vpack.c.b16 %v1126, %v1122
    %v1299 = vpack.c.b16 %v1127, %v1123
    %v1300 = vpack.c.b16 %v1128, %v1124
    %v1301 = vpack.c.b16 %v1133, %v1129
    %v1302 = vpack.c.b16 %v1134, %v1130
    %v1303 = vpack.c.b16 %v1135, %v1131
    %v1304 = vpack.c.b16 %v1136, %v1132
    %v1305 = vpack.c.b16 %v1141, %v1137
    %v1306 = vpack.c.b16 %v1142, %v1138
    %v1307 = vpack.c.b16 %v1143, %v1139
    %v1308 = vpack.c.b16 %v1144, %v1140
    %v1309 = vpack.c.b16 %v1149, %v1145
    %v1310 = vpack.c.b16 %v1150, %v1146
    %v1311 = vpack.c.b16 %v1151, %v1147
    %v1312 = vpack.c.b16 %v1152, %v1148
    %v1313 = vpack.c.b16 %v1157, %v1153
    %v1314 = vpack.c.b16 %v1158, %v1154
    %v1315 = vpack.c.b16 %v1159, %v1155
    %v1316 = vpack.c.b16 %v1160, %v1156
    %v1317 = vpack.c.b16 %v1165, %v1161
    %v1318 = vpack.c.b16 %v1166, %v1162
    %v1319 = vpack.c.b16 %v1167, %v1163
    %v1320 = vpack.c.b16 %v1168, %v1164
    %v1321 = vpack.c.b16 %v1173, %v1169
    %v1322 = vpack.c.b16 %v1174, %v1170
    %v1323 = vpack.c.b16 %v1175, %v1171
    %v1324 = vpack.c.b16 %v1176, %v1172
    %v1325 = vpack.c.b16 %v1181, %v1177
    %v1326 = vpack.c.b16 %v1182, %v1178
    %v1327 = vpack.c.b16 %v1183, %v1179
    %v1328 = vpack.c.b16 %v1184, %v1180
    %v1329 = vpack.c.b16 %v1189, %v1185
    %v1330 = vpack.c.b16 %v1190, %v1186
    %v1331 = vpack.c.b16 %v1191, %v1187
    %v1332 = vpack.c.b16 %v1192, %v1188
    %v1333 = vpack.c.b16 %v1197, %v1193
    %v1334 = vpack.c.b16 %v1198, %v1194
    %v1335 = vpack.c.b16 %v1199, %v1195
    %v1336 = vpack.c.b16 %v1200, %v1196
    %v1337 = vpack.c.b16 %v1205, %v1201
    %v1338 = vpack.c.b16 %v1206, %v1202
    %v1339 = vpack.c.b16 %v1207, %v1203
    %v1340 = vpack.c.b16 %v1208, %v1204
    %v1341 = vpack.c.b16 %v1213, %v1209
    %v1342 = vpack.c.b16 %v1214, %v1210
    %v1343 = vpack.c.b16 %v1215, %v1211
    %v1344 = vpack.c.b16 %v1216, %v1212
    %1473 = vmatprep.subr.bf16.mxu0 %v1218
    %1474 = vmatpush1.bf16.msra.mxu0 %v1217
    %1475 = vmatprep.subr.bf16.mxu0 %v1222
    %1476 = vmatpush1.bf16.msra.mxu0 %v1221
    %1477 = vmatprep.subr.bf16.mxu0 %v1226
    %1478 = vmatpush1.bf16.msra.mxu0 %v1225
    %1479 = vmatprep.subr.bf16.mxu0 %v1230
    %1480 = vmatpush1.bf16.msra.mxu0 %v1229
    %1481 = vmatprep.subr.bf16.mxu0 %v1234
    %1482 = vmatpush1.bf16.msra.mxu0 %v1233
    %1483 = vmatprep.subr.bf16.mxu0 %v1238
    %1484 = vmatpush1.bf16.msra.mxu0 %v1237
    %1485 = vmatprep.subr.bf16.mxu0 %v1242
    %1486 = vmatpush1.bf16.msra.mxu0 %v1241
    %1487 = vmatprep.subr.bf16.mxu0 %v1246
    %1488 = vmatpush1.bf16.msra.mxu0 %v1245
    %1489 = vmatprep.subr.bf16.mxu0 %v1250
    %1490 = vmatpush1.bf16.msra.mxu0 %v1249
    %1491 = vmatprep.subr.bf16.mxu0 %v1254
    %1492 = vmatpush1.bf16.msra.mxu0 %v1253
    %1493 = vmatprep.subr.bf16.mxu0 %v1258
    %1494 = vmatpush1.bf16.msra.mxu0 %v1257
    %1495 = vmatprep.subr.bf16.mxu0 %v1262
    %1496 = vmatpush1.bf16.msra.mxu0 %v1261
    %1497 = vmatprep.subr.bf16.mxu0 %v1266
    %1498 = vmatpush1.bf16.msra.mxu0 %v1265
    %1499 = vmatprep.subr.bf16.mxu0 %v1270
    %1500 = vmatpush1.bf16.msra.mxu0 %v1269
    %1501 = vmatprep.subr.bf16.mxu0 %v1274
    %1502 = vmatpush1.bf16.msra.mxu0 %v1273
    %1503 = vmatprep.subr.bf16.mxu0 %v1278
    %1504 = vmatpush1.bf16.msra.mxu0 %v1277
    %1505 = vmatprep.mubr.bf16.mxu0 %v702
    %1506 = vmatmul.mubr.bf16.gmra.mrb[0].mxu0 %v701
    %v1507 = vpop.f32.mrb[0].mxu0
    %v1508 = vadd.f32 0.0, %v1507
    %v1509 = vpop.f32.mrb[0].mxu0
    %v1510 = vadd.f32 0.0, %v1509
    %v1511 = vpop.f32.mrb[0].mxu0
    %v1512 = vpop.f32.mrb[0].mxu0
    %1513 = vdwg.mxu0
    %1514 = vmatprep.subr.bf16.mxu0 %v1282
    %1515 = vmatpush1.bf16.msra.mxu0 %v1281
    %1516 = vmatprep.subr.bf16.mxu0 %v1286
    %1517 = vmatpush1.bf16.msra.mxu0 %v1285
    %1518 = vmatprep.subr.bf16.mxu0 %v1290
    %1519 = vmatpush1.bf16.msra.mxu0 %v1289
    %1520 = vmatprep.subr.bf16.mxu0 %v1294
    %1521 = vmatpush1.bf16.msra.mxu0 %v1293
    %1522 = vmatprep.subr.bf16.mxu0 %v1298
    %1523 = vmatpush1.bf16.msra.mxu0 %v1297
    %1524 = vmatprep.subr.bf16.mxu0 %v1302
    %1525 = vmatpush1.bf16.msra.mxu0 %v1301
    %1526 = vmatprep.subr.bf16.mxu0 %v1306
    %1527 = vmatpush1.bf16.msra.mxu0 %v1305
    %1528 = vmatprep.subr.bf16.mxu0 %v1310
    %1529 = vmatpush1.bf16.msra.mxu0 %v1309
    %1530 = vmatprep.subr.bf16.mxu0 %v1314
    %1531 = vmatpush1.bf16.msra.mxu0 %v1313
    %1532 = vmatprep.subr.bf16.mxu0 %v1318
    %1533 = vmatpush1.bf16.msra.mxu0 %v1317
    %1534 = vmatprep.subr.bf16.mxu0 %v1322
    %1535 = vmatpush1.bf16.msra.mxu0 %v1321
    %1536 = vmatprep.subr.bf16.mxu0 %v1326
    %1537 = vmatpush1.bf16.msra.mxu0 %v1325
    %1538 = vmatprep.subr.bf16.mxu0 %v1330
    %1539 = vmatpush1.bf16.msra.mxu0 %v1329
    %1540 = vmatprep.subr.bf16.mxu0 %v1334
    %1541 = vmatpush1.bf16.msra.mxu0 %v1333
    %1542 = vmatprep.subr.bf16.mxu0 %v1338
    %1543 = vmatpush1.bf16.msra.mxu0 %v1337
    %1544 = vmatprep.subr.bf16.mxu0 %v1342
    %1545 = vmatpush1.bf16.msra.mxu0 %v1341
    %1546 = vmatprep.mubr.bf16.mxu0 %v704
    %1547 = vmatmul.mubr.bf16.gmra.mrb[0].mxu0 %v703
    %v1548 = vpop.f32.mrb[0].mxu0
    %v1549 = vadd.f32 %v1508, %v1548
    %v1550 = vpop.f32.mrb[0].mxu0
    %v1551 = vadd.f32 %v1510, %v1550
    %v1552 = vpop.f32.mrb[0].mxu0
    %v1553 = vpop.f32.mrb[0].mxu0
    %1554 = vdwg.mxu0
    %1555 = vmatprep.subr.bf16.mxu0 %v1220
    %1556 = vmatpush1.bf16.msra.mxu0 %v1219
    %1557 = vmatprep.subr.bf16.mxu0 %v1224
    %1558 = vmatpush1.bf16.msra.mxu0 %v1223
    %1559 = vmatprep.subr.bf16.mxu0 %v1228
    %1560 = vmatpush1.bf16.msra.mxu0 %v1227
    %1561 = vmatprep.subr.bf16.mxu0 %v1232
    %1562 = vmatpush1.bf16.msra.mxu0 %v1231
    %1563 = vmatprep.subr.bf16.mxu0 %v1236
    %1564 = vmatpush1.bf16.msra.mxu0 %v1235
    %1565 = vmatprep.subr.bf16.mxu0 %v1240
    %1566 = vmatpush1.bf16.msra.mxu0 %v1239
    %1567 = vmatprep.subr.bf16.mxu0 %v1244
    %1568 = vmatpush1.bf16.msra.mxu0 %v1243
    %1569 = vmatprep.subr.bf16.mxu0 %v1248
    %1570 = vmatpush1.bf16.msra.mxu0 %v1247
    %1571 = vmatprep.subr.bf16.mxu0 %v1252
    %1572 = vmatpush1.bf16.msra.mxu0 %v1251
    %1573 = vmatprep.subr.bf16.mxu0 %v1256
    %1574 = vmatpush1.bf16.msra.mxu0 %v1255
    %1575 = vmatprep.subr.bf16.mxu0 %v1260
    %1576 = vmatpush1.bf16.msra.mxu0 %v1259
    %1577 = vmatprep.subr.bf16.mxu0 %v1264
    %1578 = vmatpush1.bf16.msra.mxu0 %v1263
    %1579 = vmatprep.subr.bf16.mxu0 %v1268
    %1580 = vmatpush1.bf16.msra.mxu0 %v1267
    %1581 = vmatprep.subr.bf16.mxu0 %v1272
    %1582 = vmatpush1.bf16.msra.mxu0 %v1271
    %1583 = vmatprep.subr.bf16.mxu0 %v1276
    %1584 = vmatpush1.bf16.msra.mxu0 %v1275
    %1585 = vmatprep.subr.bf16.mxu0 %v1280
    %1586 = vmatpush1.bf16.msra.mxu0 %v1279
    %1587 = vmatprep.mubr.bf16.mxu0 %v702
    %1588 = vmatmul.mubr.bf16.gmra.mrb[0].mxu0 %v701
    %v1589 = vpop.f32.mrb[0].mxu0
    %v1590 = vadd.f32 0.0, %v1589
    %v1591 = vpop.f32.mrb[0].mxu0
    %v1592 = vadd.f32 0.0, %v1591
    %v1593 = vpop.f32.mrb[0].mxu0
    %v1594 = vpop.f32.mrb[0].mxu0
    %1595 = vdwg.mxu0
    %1596 = vmatprep.subr.bf16.mxu0 %v1284
    %1597 = vmatpush1.bf16.msra.mxu0 %v1283
    %1598 = vmatprep.subr.bf16.mxu0 %v1288
    %1599 = vmatpush1.bf16.msra.mxu0 %v1287
    %1600 = vmatprep.subr.bf16.mxu0 %v1292
    %1601 = vmatpush1.bf16.msra.mxu0 %v1291
    %1602 = vmatprep.subr.bf16.mxu0 %v1296
    %1603 = vmatpush1.bf16.msra.mxu0 %v1295
    %1604 = vmatprep.subr.bf16.mxu0 %v1300
    %1605 = vmatpush1.bf16.msra.mxu0 %v1299
    %1606 = vmatprep.subr.bf16.mxu0 %v1304
    %1607 = vmatpush1.bf16.msra.mxu0 %v1303
    %1608 = vmatprep.subr.bf16.mxu0 %v1308
    %1609 = vmatpush1.bf16.msra.mxu0 %v1307
    %1610 = vmatprep.subr.bf16.mxu0 %v1312
    %1611 = vmatpush1.bf16.msra.mxu0 %v1311
    %1612 = vmatprep.subr.bf16.mxu0 %v1316
    %1613 = vmatpush1.bf16.msra.mxu0 %v1315
    %1614 = vmatprep.subr.bf16.mxu0 %v1320
    %1615 = vmatpush1.bf16.msra.mxu0 %v1319
    %1616 = vmatprep.subr.bf16.mxu0 %v1324
    %1617 = vmatpush1.bf16.msra.mxu0 %v1323
    %1618 = vmatprep.subr.bf16.mxu0 %v1328
    %1619 = vmatpush1.bf16.msra.mxu0 %v1327
    %1620 = vmatprep.subr.bf16.mxu0 %v1332
    %1621 = vmatpush1.bf16.msra.mxu0 %v1331
    %1622 = vmatprep.subr.bf16.mxu0 %v1336
    %1623 = vmatpush1.bf16.msra.mxu0 %v1335
    %1624 = vmatprep.subr.bf16.mxu0 %v1340
    %1625 = vmatpush1.bf16.msra.mxu0 %v1339
    %1626 = vmatprep.subr.bf16.mxu0 %v1344
    %1627 = vmatpush1.bf16.msra.mxu0 %v1343
    %1628 = vmatprep.mubr.bf16.mxu0 %v704
    %1629 = vmatmul.mubr.bf16.gmra.mrb[0].mxu0 %v703
    %v1630 = vpop.f32.mrb[0].mxu0
    %v1631 = vadd.f32 %v1590, %v1630
    %v1632 = vpop.f32.mrb[0].mxu0
    %v1633 = vadd.f32 %v1592, %v1632
    %v1634 = vpop.f32.mrb[0].mxu0
    %v1635 = vpop.f32.mrb[0].mxu0
    %1636 = vdwg.mxu0
    %v1637 = vpack.c.bf16 %v697, %v697
    %v1638 = vpack.c.bf16 %v698, %v698
    %v1639 = vpack.c.bf16 %v699, %v699
    %v1640 = vpack.c.bf16 %v700, %v700
    %v1641 = vld [vmem:[#allocation5 + $0x400] sm:$0xff]
    %v1642 = vld [vmem:[#allocation5 + $0x408] sm:$0xff]
    %v1643 = vld [vmem:[#allocation5 + $0x410] sm:$0xff]
    %v1644 = vld [vmem:[#allocation5 + $0x418] sm:$0xff]
    %v1645 = vld [vmem:[#allocation5 + $0x420] sm:$0xff]
    %v1646 = vld [vmem:[#allocation5 + $0x428] sm:$0xff]
    %v1647 = vld [vmem:[#allocation5 + $0x430] sm:$0xff]
    %v1648 = vld [vmem:[#allocation5 + $0x438] sm:$0xff]
    %v1649 = vld [vmem:[#allocation5 + $0x440] sm:$0xff]
    %v1650 = vld [vmem:[#allocation5 + $0x448] sm:$0xff]
    %v1651 = vld [vmem:[#allocation5 + $0x450] sm:$0xff]
    %v1652 = vld [vmem:[#allocation5 + $0x458] sm:$0xff]
    %v1653 = vld [vmem:[#allocation5 + $0x460] sm:$0xff]
    %v1654 = vld [vmem:[#allocation5 + $0x468] sm:$0xff]
    %v1655 = vld [vmem:[#allocation5 + $0x470] sm:$0xff]
    %v1656 = vld [vmem:[#allocation5 + $0x478] sm:$0xff]
    %v1657 = vld [vmem:[#allocation5 + $0x480] sm:$0xff]
    %v1658 = vld [vmem:[#allocation5 + $0x488] sm:$0xff]
    %v1659 = vld [vmem:[#allocation5 + $0x490] sm:$0xff]
    %v1660 = vld [vmem:[#allocation5 + $0x498] sm:$0xff]
    %v1661 = vld [vmem:[#allocation5 + $0x4a0] sm:$0xff]
    %v1662 = vld [vmem:[#allocation5 + $0x4a8] sm:$0xff]
    %v1663 = vld [vmem:[#allocation5 + $0x4b0] sm:$0xff]
    %v1664 = vld [vmem:[#allocation5 + $0x4b8] sm:$0xff]
    %v1665 = vld [vmem:[#allocation5 + $0x4c0] sm:$0xff]
    %v1666 = vld [vmem:[#allocation5 + $0x4c8] sm:$0xff]
    %v1667 = vld [vmem:[#allocation5 + $0x4d0] sm:$0xff]
    %v1668 = vld [vmem:[#allocation5 + $0x4d8] sm:$0xff]
    %v1669 = vld [vmem:[#allocation5 + $0x4e0] sm:$0xff]
    %v1670 = vld [vmem:[#allocation5 + $0x4e8] sm:$0xff]
    %v1671 = vld [vmem:[#allocation5 + $0x4f0] sm:$0xff]
    %v1672 = vld [vmem:[#allocation5 + $0x4f8] sm:$0xff]
    %v1673 = vld [vmem:[#allocation5 + $0x500] sm:$0xff]
    %v1674 = vld [vmem:[#allocation5 + $0x508] sm:$0xff]
    %v1675 = vld [vmem:[#allocation5 + $0x510] sm:$0xff]
    %v1676 = vld [vmem:[#allocation5 + $0x518] sm:$0xff]
    %v1677 = vld [vmem:[#allocation5 + $0x520] sm:$0xff]
    %v1678 = vld [vmem:[#allocation5 + $0x528] sm:$0xff]
    %v1679 = vld [vmem:[#allocation5 + $0x530] sm:$0xff]
    %v1680 = vld [vmem:[#allocation5 + $0x538] sm:$0xff]
    %v1681 = vld [vmem:[#allocation5 + $0x540] sm:$0xff]
    %v1682 = vld [vmem:[#allocation5 + $0x548] sm:$0xff]
    %v1683 = vld [vmem:[#allocation5 + $0x550] sm:$0xff]
    %v1684 = vld [vmem:[#allocation5 + $0x558] sm:$0xff]
    %v1685 = vld [vmem:[#allocation5 + $0x560] sm:$0xff]
    %v1686 = vld [vmem:[#allocation5 + $0x568] sm:$0xff]
    %v1687 = vld [vmem:[#allocation5 + $0x570] sm:$0xff]
    %v1688 = vld [vmem:[#allocation5 + $0x578] sm:$0xff]
    %v1689 = vld [vmem:[#allocation5 + $0x580] sm:$0xff]
    %v1690 = vld [vmem:[#allocation5 + $0x588] sm:$0xff]
    %v1691 = vld [vmem:[#allocation5 + $0x590] sm:$0xff]
    %v1692 = vld [vmem:[#allocation5 + $0x598] sm:$0xff]
    %v1693 = vld [vmem:[#allocation5 + $0x5a0] sm:$0xff]
    %v1694 = vld [vmem:[#allocation5 + $0x5a8] sm:$0xff]
    %v1695 = vld [vmem:[#allocation5 + $0x5b0] sm:$0xff]
    %v1696 = vld [vmem:[#allocation5 + $0x5b8] sm:$0xff]
    %v1697 = vld [vmem:[#allocation5 + $0x5c0] sm:$0xff]
    %v1698 = vld [vmem:[#allocation5 + $0x5c8] sm:$0xff]
    %v1699 = vld [vmem:[#allocation5 + $0x5d0] sm:$0xff]
    %v1700 = vld [vmem:[#allocation5 + $0x5d8] sm:$0xff]
    %v1701 = vld [vmem:[#allocation5 + $0x5e0] sm:$0xff]
    %v1702 = vld [vmem:[#allocation5 + $0x5e8] sm:$0xff]
    %v1703 = vld [vmem:[#allocation5 + $0x5f0] sm:$0xff]
    %v1704 = vld [vmem:[#allocation5 + $0x5f8] sm:$0xff]
    %v1705 = vld [vmem:[#allocation5 + $0x600] sm:$0xff]
    %v1706 = vld [vmem:[#allocation5 + $0x608] sm:$0xff]
    %v1707 = vld [vmem:[#allocation5 + $0x610] sm:$0xff]
    %v1708 = vld [vmem:[#allocation5 + $0x618] sm:$0xff]
    %v1709 = vld [vmem:[#allocation5 + $0x620] sm:$0xff]
    %v1710 = vld [vmem:[#allocation5 + $0x628] sm:$0xff]
    %v1711 = vld [vmem:[#allocation5 + $0x630] sm:$0xff]
    %v1712 = vld [vmem:[#allocation5 + $0x638] sm:$0xff]
    %v1713 = vld [vmem:[#allocation5 + $0x640] sm:$0xff]
    %v1714 = vld [vmem:[#allocation5 + $0x648] sm:$0xff]
    %v1715 = vld [vmem:[#allocation5 + $0x650] sm:$0xff]
    %v1716 = vld [vmem:[#allocation5 + $0x658] sm:$0xff]
    %v1717 = vld [vmem:[#allocation5 + $0x660] sm:$0xff]
    %v1718 = vld [vmem:[#allocation5 + $0x668] sm:$0xff]
    %v1719 = vld [vmem:[#allocation5 + $0x670] sm:$0xff]
    %v1720 = vld [vmem:[#allocation5 + $0x678] sm:$0xff]
    %v1721 = vld [vmem:[#allocation5 + $0x680] sm:$0xff]
    %v1722 = vld [vmem:[#allocation5 + $0x688] sm:$0xff]
    %v1723 = vld [vmem:[#allocation5 + $0x690] sm:$0xff]
    %v1724 = vld [vmem:[#allocation5 + $0x698] sm:$0xff]
    %v1725 = vld [vmem:[#allocation5 + $0x6a0] sm:$0xff]
    %v1726 = vld [vmem:[#allocation5 + $0x6a8] sm:$0xff]
    %v1727 = vld [vmem:[#allocation5 + $0x6b0] sm:$0xff]
    %v1728 = vld [vmem:[#allocation5 + $0x6b8] sm:$0xff]
    %v1729 = vld [vmem:[#allocation5 + $0x6c0] sm:$0xff]
    %v1730 = vld [vmem:[#allocation5 + $0x6c8] sm:$0xff]
    %v1731 = vld [vmem:[#allocation5 + $0x6d0] sm:$0xff]
    %v1732 = vld [vmem:[#allocation5 + $0x6d8] sm:$0xff]
    %v1733 = vld [vmem:[#allocation5 + $0x6e0] sm:$0xff]
    %v1734 = vld [vmem:[#allocation5 + $0x6e8] sm:$0xff]
    %v1735 = vld [vmem:[#allocation5 + $0x6f0] sm:$0xff]
    %v1736 = vld [vmem:[#allocation5 + $0x6f8] sm:$0xff]
    %v1737 = vld [vmem:[#allocation5 + $0x700] sm:$0xff]
    %v1738 = vld [vmem:[#allocation5 + $0x708] sm:$0xff]
    %v1739 = vld [vmem:[#allocation5 + $0x710] sm:$0xff]
    %v1740 = vld [vmem:[#allocation5 + $0x718] sm:$0xff]
    %v1741 = vld [vmem:[#allocation5 + $0x720] sm:$0xff]
    %v1742 = vld [vmem:[#allocation5 + $0x728] sm:$0xff]
    %v1743 = vld [vmem:[#allocation5 + $0x730] sm:$0xff]
    %v1744 = vld [vmem:[#allocation5 + $0x738] sm:$0xff]
    %v1745 = vld [vmem:[#allocation5 + $0x740] sm:$0xff]
    %v1746 = vld [vmem:[#allocation5 + $0x748] sm:$0xff]
    %v1747 = vld [vmem:[#allocation5 + $0x750] sm:$0xff]
    %v1748 = vld [vmem:[#allocation5 + $0x758] sm:$0xff]
    %v1749 = vld [vmem:[#allocation5 + $0x760] sm:$0xff]
    %v1750 = vld [vmem:[#allocation5 + $0x768] sm:$0xff]
    %v1751 = vld [vmem:[#allocation5 + $0x770] sm:$0xff]
    %v1752 = vld [vmem:[#allocation5 + $0x778] sm:$0xff]
    %v1753 = vld [vmem:[#allocation5 + $0x780] sm:$0xff]
    %v1754 = vld [vmem:[#allocation5 + $0x788] sm:$0xff]
    %v1755 = vld [vmem:[#allocation5 + $0x790] sm:$0xff]
    %v1756 = vld [vmem:[#allocation5 + $0x798] sm:$0xff]
    %v1757 = vld [vmem:[#allocation5 + $0x7a0] sm:$0xff]
    %v1758 = vld [vmem:[#allocation5 + $0x7a8] sm:$0xff]
    %v1759 = vld [vmem:[#allocation5 + $0x7b0] sm:$0xff]
    %v1760 = vld [vmem:[#allocation5 + $0x7b8] sm:$0xff]
    %v1761 = vld [vmem:[#allocation5 + $0x7c0] sm:$0xff]
    %v1762 = vld [vmem:[#allocation5 + $0x7c8] sm:$0xff]
    %v1763 = vld [vmem:[#allocation5 + $0x7d0] sm:$0xff]
    %v1764 = vld [vmem:[#allocation5 + $0x7d8] sm:$0xff]
    %v1765 = vld [vmem:[#allocation5 + $0x7e0] sm:$0xff]
    %v1766 = vld [vmem:[#allocation5 + $0x7e8] sm:$0xff]
    %v1767 = vld [vmem:[#allocation5 + $0x7f0] sm:$0xff]
    %v1768 = vld [vmem:[#allocation5 + $0x7f8] sm:$0xff]
    %v1897 = vunpack.c.l.b16 %v1641
    %v1898 = vunpack.c.h.b16 %v1641
    %v1899 = vunpack.c.l.b16 %v1642
    %v1900 = vunpack.c.h.b16 %v1642
    %v1901 = vunpack.c.l.b16 %v1643
    %v1902 = vunpack.c.h.b16 %v1643
    %v1903 = vunpack.c.l.b16 %v1644
    %v1904 = vunpack.c.h.b16 %v1644
    %v1905 = vunpack.c.l.b16 %v1645
    %v1906 = vunpack.c.h.b16 %v1645
    %v1907 = vunpack.c.l.b16 %v1646
    %v1908 = vunpack.c.h.b16 %v1646
    %v1909 = vunpack.c.l.b16 %v1647
    %v1910 = vunpack.c.h.b16 %v1647
    %v1911 = vunpack.c.l.b16 %v1648
    %v1912 = vunpack.c.h.b16 %v1648
    %v1913 = vunpack.c.l.b16 %v1649
    %v1914 = vunpack.c.h.b16 %v1649
    %v1915 = vunpack.c.l.b16 %v1650
    %v1916 = vunpack.c.h.b16 %v1650
    %v1917 = vunpack.c.l.b16 %v1651
    %v1918 = vunpack.c.h.b16 %v1651
    %v1919 = vunpack.c.l.b16 %v1652
    %v1920 = vunpack.c.h.b16 %v1652
    %v1921 = vunpack.c.l.b16 %v1653
    %v1922 = vunpack.c.h.b16 %v1653
    %v1923 = vunpack.c.l.b16 %v1654
    %v1924 = vunpack.c.h.b16 %v1654
    %v1925 = vunpack.c.l.b16 %v1655
    %v1926 = vunpack.c.h.b16 %v1655
    %v1927 = vunpack.c.l.b16 %v1656
    %v1928 = vunpack.c.h.b16 %v1656
    %v1929 = vunpack.c.l.b16 %v1657
    %v1930 = vunpack.c.h.b16 %v1657
    %v1931 = vunpack.c.l.b16 %v1658
    %v1932 = vunpack.c.h.b16 %v1658
    %v1933 = vunpack.c.l.b16 %v1659
    %v1934 = vunpack.c.h.b16 %v1659
    %v1935 = vunpack.c.l.b16 %v1660
    %v1936 = vunpack.c.h.b16 %v1660
    %v1937 = vunpack.c.l.b16 %v1661
    %v1938 = vunpack.c.h.b16 %v1661
    %v1939 = vunpack.c.l.b16 %v1662
    %v1940 = vunpack.c.h.b16 %v1662
    %v1941 = vunpack.c.l.b16 %v1663
    %v1942 = vunpack.c.h.b16 %v1663
    %v1943 = vunpack.c.l.b16 %v1664
    %v1944 = vunpack.c.h.b16 %v1664
    %v1945 = vunpack.c.l.b16 %v1665
    %v1946 = vunpack.c.h.b16 %v1665
    %v1947 = vunpack.c.l.b16 %v1666
    %v1948 = vunpack.c.h.b16 %v1666
    %v1949 = vunpack.c.l.b16 %v1667
    %v1950 = vunpack.c.h.b16 %v1667
    %v1951 = vunpack.c.l.b16 %v1668
    %v1952 = vunpack.c.h.b16 %v1668
    %v1953 = vunpack.c.l.b16 %v1669
    %v1954 = vunpack.c.h.b16 %v1669
    %v1955 = vunpack.c.l.b16 %v1670
    %v1956 = vunpack.c.h.b16 %v1670
    %v1957 = vunpack.c.l.b16 %v1671
    %v1958 = vunpack.c.h.b16 %v1671
    %v1959 = vunpack.c.l.b16 %v1672
    %v1960 = vunpack.c.h.b16 %v1672
    %v1961 = vunpack.c.l.b16 %v1673
    %v1962 = vunpack.c.h.b16 %v1673
    %v1963 = vunpack.c.l.b16 %v1674
    %v1964 = vunpack.c.h.b16 %v1674
    %v1965 = vunpack.c.l.b16 %v1675
    %v1966 = vunpack.c.h.b16 %v1675
    %v1967 = vunpack.c.l.b16 %v1676
    %v1968 = vunpack.c.h.b16 %v1676
    %v1969 = vunpack.c.l.b16 %v1677
    %v1970 = vunpack.c.h.b16 %v1677
    %v1971 = vunpack.c.l.b16 %v1678
    %v1972 = vunpack.c.h.b16 %v1678
    %v1973 = vunpack.c.l.b16 %v1679
    %v1974 = vunpack.c.h.b16 %v1679
    %v1975 = vunpack.c.l.b16 %v1680
    %v1976 = vunpack.c.h.b16 %v1680
    %v1977 = vunpack.c.l.b16 %v1681
    %v1978 = vunpack.c.h.b16 %v1681
    %v1979 = vunpack.c.l.b16 %v1682
    %v1980 = vunpack.c.h.b16 %v1682
    %v1981 = vunpack.c.l.b16 %v1683
    %v1982 = vunpack.c.h.b16 %v1683
    %v1983 = vunpack.c.l.b16 %v1684
    %v1984 = vunpack.c.h.b16 %v1684
    %v1985 = vunpack.c.l.b16 %v1685
    %v1986 = vunpack.c.h.b16 %v1685
    %v1987 = vunpack.c.l.b16 %v1686
    %v1988 = vunpack.c.h.b16 %v1686
    %v1989 = vunpack.c.l.b16 %v1687
    %v1990 = vunpack.c.h.b16 %v1687
    %v1991 = vunpack.c.l.b16 %v1688
    %v1992 = vunpack.c.h.b16 %v1688
    %v1993 = vunpack.c.l.b16 %v1689
    %v1994 = vunpack.c.h.b16 %v1689
    %v1995 = vunpack.c.l.b16 %v1690
    %v1996 = vunpack.c.h.b16 %v1690
    %v1997 = vunpack.c.l.b16 %v1691
    %v1998 = vunpack.c.h.b16 %v1691
    %v1999 = vunpack.c.l.b16 %v1692
    %v2000 = vunpack.c.h.b16 %v1692
    %v2001 = vunpack.c.l.b16 %v1693
    %v2002 = vunpack.c.h.b16 %v1693
    %v2003 = vunpack.c.l.b16 %v1694
    %v2004 = vunpack.c.h.b16 %v1694
    %v2005 = vunpack.c.l.b16 %v1695
    %v2006 = vunpack.c.h.b16 %v1695
    %v2007 = vunpack.c.l.b16 %v1696
    %v2008 = vunpack.c.h.b16 %v1696
    %v2009 = vunpack.c.l.b16 %v1697
    %v2010 = vunpack.c.h.b16 %v1697
    %v2011 = vunpack.c.l.b16 %v1698
    %v2012 = vunpack.c.h.b16 %v1698
    %v2013 = vunpack.c.l.b16 %v1699
    %v2014 = vunpack.c.h.b16 %v1699
    %v2015 = vunpack.c.l.b16 %v1700
    %v2016 = vunpack.c.h.b16 %v1700
    %v2017 = vunpack.c.l.b16 %v1701
    %v2018 = vunpack.c.h.b16 %v1701
    %v2019 = vunpack.c.l.b16 %v1702
    %v2020 = vunpack.c.h.b16 %v1702
    %v2021 = vunpack.c.l.b16 %v1703
    %v2022 = vunpack.c.h.b16 %v1703
    %v2023 = vunpack.c.l.b16 %v1704
    %v2024 = vunpack.c.h.b16 %v1704
    %v2025 = vunpack.c.l.b16 %v1705
    %v2026 = vunpack.c.h.b16 %v1705
    %v2027 = vunpack.c.l.b16 %v1706
    %v2028 = vunpack.c.h.b16 %v1706
    %v2029 = vunpack.c.l.b16 %v1707
    %v2030 = vunpack.c.h.b16 %v1707
    %v2031 = vunpack.c.l.b16 %v1708
    %v2032 = vunpack.c.h.b16 %v1708
    %v2033 = vunpack.c.l.b16 %v1709
    %v2034 = vunpack.c.h.b16 %v1709
    %v2035 = vunpack.c.l.b16 %v1710
    %v2036 = vunpack.c.h.b16 %v1710
    %v2037 = vunpack.c.l.b16 %v1711
    %v2038 = vunpack.c.h.b16 %v1711
    %v2039 = vunpack.c.l.b16 %v1712
    %v2040 = vunpack.c.h.b16 %v1712
    %v2041 = vunpack.c.l.b16 %v1713
    %v2042 = vunpack.c.h.b16 %v1713
    %v2043 = vunpack.c.l.b16 %v1714
    %v2044 = vunpack.c.h.b16 %v1714
    %v2045 = vunpack.c.l.b16 %v1715
    %v2046 = vunpack.c.h.b16 %v1715
    %v2047 = vunpack.c.l.b16 %v1716
    %v2048 = vunpack.c.h.b16 %v1716
    %v2049 = vunpack.c.l.b16 %v1717
    %v2050 = vunpack.c.h.b16 %v1717
    %v2051 = vunpack.c.l.b16 %v1718
    %v2052 = vunpack.c.h.b16 %v1718
    %v2053 = vunpack.c.l.b16 %v1719
    %v2054 = vunpack.c.h.b16 %v1719
    %v2055 = vunpack.c.l.b16 %v1720
    %v2056 = vunpack.c.h.b16 %v1720
    %v2057 = vunpack.c.l.b16 %v1721
    %v2058 = vunpack.c.h.b16 %v1721
    %v2059 = vunpack.c.l.b16 %v1722
    %v2060 = vunpack.c.h.b16 %v1722
    %v2061 = vunpack.c.l.b16 %v1723
    %v2062 = vunpack.c.h.b16 %v1723
    %v2063 = vunpack.c.l.b16 %v1724
    %v2064 = vunpack.c.h.b16 %v1724
    %v2065 = vunpack.c.l.b16 %v1725
    %v2066 = vunpack.c.h.b16 %v1725
    %v2067 = vunpack.c.l.b16 %v1726
    %v2068 = vunpack.c.h.b16 %v1726
    %v2069 = vunpack.c.l.b16 %v1727
    %v2070 = vunpack.c.h.b16 %v1727
    %v2071 = vunpack.c.l.b16 %v1728
    %v2072 = vunpack.c.h.b16 %v1728
    %v2073 = vunpack.c.l.b16 %v1729
    %v2074 = vunpack.c.h.b16 %v1729
    %v2075 = vunpack.c.l.b16 %v1730
    %v2076 = vunpack.c.h.b16 %v1730
    %v2077 = vunpack.c.l.b16 %v1731
    %v2078 = vunpack.c.h.b16 %v1731
    %v2079 = vunpack.c.l.b16 %v1732
    %v2080 = vunpack.c.h.b16 %v1732
    %v2081 = vunpack.c.l.b16 %v1733
    %v2082 = vunpack.c.h.b16 %v1733
    %v2083 = vunpack.c.l.b16 %v1734
    %v2084 = vunpack.c.h.b16 %v1734
    %v2085 = vunpack.c.l.b16 %v1735
    %v2086 = vunpack.c.h.b16 %v1735
    %v2087 = vunpack.c.l.b16 %v1736
    %v2088 = vunpack.c.h.b16 %v1736
    %v2089 = vunpack.c.l.b16 %v1737
    %v2090 = vunpack.c.h.b16 %v1737
    %v2091 = vunpack.c.l.b16 %v1738
    %v2092 = vunpack.c.h.b16 %v1738
    %v2093 = vunpack.c.l.b16 %v1739
    %v2094 = vunpack.c.h.b16 %v1739
    %v2095 = vunpack.c.l.b16 %v1740
    %v2096 = vunpack.c.h.b16 %v1740
    %v2097 = vunpack.c.l.b16 %v1741
    %v2098 = vunpack.c.h.b16 %v1741
    %v2099 = vunpack.c.l.b16 %v1742
    %v2100 = vunpack.c.h.b16 %v1742
    %v2101 = vunpack.c.l.b16 %v1743
    %v2102 = vunpack.c.h.b16 %v1743
    %v2103 = vunpack.c.l.b16 %v1744
    %v2104 = vunpack.c.h.b16 %v1744
    %v2105 = vunpack.c.l.b16 %v1745
    %v2106 = vunpack.c.h.b16 %v1745
    %v2107 = vunpack.c.l.b16 %v1746
    %v2108 = vunpack.c.h.b16 %v1746
    %v2109 = vunpack.c.l.b16 %v1747
    %v2110 = vunpack.c.h.b16 %v1747
    %v2111 = vunpack.c.l.b16 %v1748
    %v2112 = vunpack.c.h.b16 %v1748
    %v2113 = vunpack.c.l.b16 %v1749
    %v2114 = vunpack.c.h.b16 %v1749
    %v2115 = vunpack.c.l.b16 %v1750
    %v2116 = vunpack.c.h.b16 %v1750
    %v2117 = vunpack.c.l.b16 %v1751
    %v2118 = vunpack.c.h.b16 %v1751
    %v2119 = vunpack.c.l.b16 %v1752
    %v2120 = vunpack.c.h.b16 %v1752
    %v2121 = vunpack.c.l.b16 %v1753
    %v2122 = vunpack.c.h.b16 %v1753
    %v2123 = vunpack.c.l.b16 %v1754
    %v2124 = vunpack.c.h.b16 %v1754
    %v2125 = vunpack.c.l.b16 %v1755
    %v2126 = vunpack.c.h.b16 %v1755
    %v2127 = vunpack.c.l.b16 %v1756
    %v2128 = vunpack.c.h.b16 %v1756
    %v2129 = vunpack.c.l.b16 %v1757
    %v2130 = vunpack.c.h.b16 %v1757
    %v2131 = vunpack.c.l.b16 %v1758
    %v2132 = vunpack.c.h.b16 %v1758
    %v2133 = vunpack.c.l.b16 %v1759
    %v2134 = vunpack.c.h.b16 %v1759
    %v2135 = vunpack.c.l.b16 %v1760
    %v2136 = vunpack.c.h.b16 %v1760
    %v2137 = vunpack.c.l.b16 %v1761
    %v2138 = vunpack.c.h.b16 %v1761
    %v2139 = vunpack.c.l.b16 %v1762
    %v2140 = vunpack.c.h.b16 %v1762
    %v2141 = vunpack.c.l.b16 %v1763
    %v2142 = vunpack.c.h.b16 %v1763
    %v2143 = vunpack.c.l.b16 %v1764
    %v2144 = vunpack.c.h.b16 %v1764
    %v2145 = vunpack.c.l.b16 %v1765
    %v2146 = vunpack.c.h.b16 %v1765
    %v2147 = vunpack.c.l.b16 %v1766
    %v2148 = vunpack.c.h.b16 %v1766
    %v2149 = vunpack.c.l.b16 %v1767
    %v2150 = vunpack.c.h.b16 %v1767
    %v2151 = vunpack.c.l.b16 %v1768
    %v2152 = vunpack.c.h.b16 %v1768
    %v2153 = vpack.c.b16 %v1901, %v1897
    %v2154 = vpack.c.b16 %v1902, %v1898
    %v2155 = vpack.c.b16 %v1903, %v1899
    %v2156 = vpack.c.b16 %v1904, %v1900
    %v2157 = vpack.c.b16 %v1909, %v1905
    %v2158 = vpack.c.b16 %v1910, %v1906
    %v2159 = vpack.c.b16 %v1911, %v1907
    %v2160 = vpack.c.b16 %v1912, %v1908
    %v2161 = vpack.c.b16 %v1917, %v1913
    %v2162 = vpack.c.b16 %v1918, %v1914
    %v2163 = vpack.c.b16 %v1919, %v1915
    %v2164 = vpack.c.b16 %v1920, %v1916
    %v2165 = vpack.c.b16 %v1925, %v1921
    %v2166 = vpack.c.b16 %v1926, %v1922
    %v2167 = vpack.c.b16 %v1927, %v1923
    %v2168 = vpack.c.b16 %v1928, %v1924
    %v2169 = vpack.c.b16 %v1933, %v1929
    %v2170 = vpack.c.b16 %v1934, %v1930
    %v2171 = vpack.c.b16 %v1935, %v1931
    %v2172 = vpack.c.b16 %v1936, %v1932
    %v2173 = vpack.c.b16 %v1941, %v1937
    %v2174 = vpack.c.b16 %v1942, %v1938
    %v2175 = vpack.c.b16 %v1943, %v1939
    %v2176 = vpack.c.b16 %v1944, %v1940
    %v2177 = vpack.c.b16 %v1949, %v1945
    %v2178 = vpack.c.b16 %v1950, %v1946
    %v2179 = vpack.c.b16 %v1951, %v1947
    %v2180 = vpack.c.b16 %v1952, %v1948
    %v2181 = vpack.c.b16 %v1957, %v1953
    %v2182 = vpack.c.b16 %v1958, %v1954
    %v2183 = vpack.c.b16 %v1959, %v1955
    %v2184 = vpack.c.b16 %v1960, %v1956
    %v2185 = vpack.c.b16 %v1965, %v1961
    %v2186 = vpack.c.b16 %v1966, %v1962
    %v2187 = vpack.c.b16 %v1967, %v1963
    %v2188 = vpack.c.b16 %v1968, %v1964
    %v2189 = vpack.c.b16 %v1973, %v1969
    %v2190 = vpack.c.b16 %v1974, %v1970
    %v2191 = vpack.c.b16 %v1975, %v1971
    %v2192 = vpack.c.b16 %v1976, %v1972
    %v2193 = vpack.c.b16 %v1981, %v1977
    %v2194 = vpack.c.b16 %v1982, %v1978
    %v2195 = vpack.c.b16 %v1983, %v1979
    %v2196 = vpack.c.b16 %v1984, %v1980
    %v2197 = vpack.c.b16 %v1989, %v1985
    %v2198 = vpack.c.b16 %v1990, %v1986
    %v2199 = vpack.c.b16 %v1991, %v1987
    %v2200 = vpack.c.b16 %v1992, %v1988
    %v2201 = vpack.c.b16 %v1997, %v1993
    %v2202 = vpack.c.b16 %v1998, %v1994
    %v2203 = vpack.c.b16 %v1999, %v1995
    %v2204 = vpack.c.b16 %v2000, %v1996
    %v2205 = vpack.c.b16 %v2005, %v2001
    %v2206 = vpack.c.b16 %v2006, %v2002
    %v2207 = vpack.c.b16 %v2007, %v2003
    %v2208 = vpack.c.b16 %v2008, %v2004
    %v2209 = vpack.c.b16 %v2013, %v2009
    %v2210 = vpack.c.b16 %v2014, %v2010
    %v2211 = vpack.c.b16 %v2015, %v2011
    %v2212 = vpack.c.b16 %v2016, %v2012
    %v2213 = vpack.c.b16 %v2021, %v2017
    %v2214 = vpack.c.b16 %v2022, %v2018
    %v2215 = vpack.c.b16 %v2023, %v2019
    %v2216 = vpack.c.b16 %v2024, %v2020
    %v2217 = vpack.c.b16 %v2029, %v2025
    %v2218 = vpack.c.b16 %v2030, %v2026
    %v2219 = vpack.c.b16 %v2031, %v2027
    %v2220 = vpack.c.b16 %v2032, %v2028
    %v2221 = vpack.c.b16 %v2037, %v2033
    %v2222 = vpack.c.b16 %v2038, %v2034
    %v2223 = vpack.c.b16 %v2039, %v2035
    %v2224 = vpack.c.b16 %v2040, %v2036
    %v2225 = vpack.c.b16 %v2045, %v2041
    %v2226 = vpack.c.b16 %v2046, %v2042
    %v2227 = vpack.c.b16 %v2047, %v2043
    %v2228 = vpack.c.b16 %v2048, %v2044
    %v2229 = vpack.c.b16 %v2053, %v2049
    %v2230 = vpack.c.b16 %v2054, %v2050
    %v2231 = vpack.c.b16 %v2055, %v2051
    %v2232 = vpack.c.b16 %v2056, %v2052
    %v2233 = vpack.c.b16 %v2061, %v2057
    %v2234 = vpack.c.b16 %v2062, %v2058
    %v2235 = vpack.c.b16 %v2063, %v2059
    %v2236 = vpack.c.b16 %v2064, %v2060
    %v2237 = vpack.c.b16 %v2069, %v2065
    %v2238 = vpack.c.b16 %v2070, %v2066
    %v2239 = vpack.c.b16 %v2071, %v2067
    %v2240 = vpack.c.b16 %v2072, %v2068
    %v2241 = vpack.c.b16 %v2077, %v2073
    %v2242 = vpack.c.b16 %v2078, %v2074
    %v2243 = vpack.c.b16 %v2079, %v2075
    %v2244 = vpack.c.b16 %v2080, %v2076
    %v2245 = vpack.c.b16 %v2085, %v2081
    %v2246 = vpack.c.b16 %v2086, %v2082
    %v2247 = vpack.c.b16 %v2087, %v2083
    %v2248 = vpack.c.b16 %v2088, %v2084
    %v2249 = vpack.c.b16 %v2093, %v2089
    %v2250 = vpack.c.b16 %v2094, %v2090
    %v2251 = vpack.c.b16 %v2095, %v2091
    %v2252 = vpack.c.b16 %v2096, %v2092
    %v2253 = vpack.c.b16 %v2101, %v2097
    %v2254 = vpack.c.b16 %v2102, %v2098
    %v2255 = vpack.c.b16 %v2103, %v2099
    %v2256 = vpack.c.b16 %v2104, %v2100
    %v2257 = vpack.c.b16 %v2109, %v2105
    %v2258 = vpack.c.b16 %v2110, %v2106
    %v2259 = vpack.c.b16 %v2111, %v2107
    %v2260 = vpack.c.b16 %v2112, %v2108
    %v2261 = vpack.c.b16 %v2117, %v2113
    %v2262 = vpack.c.b16 %v2118, %v2114
    %v2263 = vpack.c.b16 %v2119, %v2115
    %v2264 = vpack.c.b16 %v2120, %v2116
    %v2265 = vpack.c.b16 %v2125, %v2121
    %v2266 = vpack.c.b16 %v2126, %v2122
    %v2267 = vpack.c.b16 %v2127, %v2123
    %v2268 = vpack.c.b16 %v2128, %v2124
    %v2269 = vpack.c.b16 %v2133, %v2129
    %v2270 = vpack.c.b16 %v2134, %v2130
    %v2271 = vpack.c.b16 %v2135, %v2131
    %v2272 = vpack.c.b16 %v2136, %v2132
    %v2273 = vpack.c.b16 %v2141, %v2137
    %v2274 = vpack.c.b16 %v2142, %v2138
    %v2275 = vpack.c.b16 %v2143, %v2139
    %v2276 = vpack.c.b16 %v2144, %v2140
    %v2277 = vpack.c.b16 %v2149, %v2145
    %v2278 = vpack.c.b16 %v2150, %v2146
    %v2279 = vpack.c.b16 %v2151, %v2147
    %v2280 = vpack.c.b16 %v2152, %v2148
    %2409 = vmatprep.subr.bf16.mxu0 %v2154
    %2410 = vmatpush1.bf16.msra.mxu0 %v2153
    %2411 = vmatprep.subr.bf16.mxu0 %v2158
    %2412 = vmatpush1.bf16.msra.mxu0 %v2157
    %2413 = vmatprep.subr.bf16.mxu0 %v2162
    %2414 = vmatpush1.bf16.msra.mxu0 %v2161
    %2415 = vmatprep.subr.bf16.mxu0 %v2166
    %2416 = vmatpush1.bf16.msra.mxu0 %v2165
    %2417 = vmatprep.subr.bf16.mxu0 %v2170
    %2418 = vmatpush1.bf16.msra.mxu0 %v2169
    %2419 = vmatprep.subr.bf16.mxu0 %v2174
    %2420 = vmatpush1.bf16.msra.mxu0 %v2173
    %2421 = vmatprep.subr.bf16.mxu0 %v2178
    %2422 = vmatpush1.bf16.msra.mxu0 %v2177
    %2423 = vmatprep.subr.bf16.mxu0 %v2182
    %2424 = vmatpush1.bf16.msra.mxu0 %v2181
    %2425 = vmatprep.subr.bf16.mxu0 %v2186
    %2426 = vmatpush1.bf16.msra.mxu0 %v2185
    %2427 = vmatprep.subr.bf16.mxu0 %v2190
    %2428 = vmatpush1.bf16.msra.mxu0 %v2189
    %2429 = vmatprep.subr.bf16.mxu0 %v2194
    %2430 = vmatpush1.bf16.msra.mxu0 %v2193
    %2431 = vmatprep.subr.bf16.mxu0 %v2198
    %2432 = vmatpush1.bf16.msra.mxu0 %v2197
    %2433 = vmatprep.subr.bf16.mxu0 %v2202
    %2434 = vmatpush1.bf16.msra.mxu0 %v2201
    %2435 = vmatprep.subr.bf16.mxu0 %v2206
    %2436 = vmatpush1.bf16.msra.mxu0 %v2205
    %2437 = vmatprep.subr.bf16.mxu0 %v2210
    %2438 = vmatpush1.bf16.msra.mxu0 %v2209
    %2439 = vmatprep.subr.bf16.mxu0 %v2214
    %2440 = vmatpush1.bf16.msra.mxu0 %v2213
    %2441 = vmatprep.mubr.bf16.mxu0 %v1638
    %2442 = vmatmul.mubr.bf16.gmra.mrb[0].mxu0 %v1637
    %v2443 = vpop.f32.mrb[0].mxu0
    %v2444 = vadd.f32 0.0, %v2443
    %v2445 = vpop.f32.mrb[0].mxu0
    %v2446 = vadd.f32 0.0, %v2445
    %v2447 = vpop.f32.mrb[0].mxu0
    %v2448 = vpop.f32.mrb[0].mxu0
    %2449 = vdwg.mxu0
    %2450 = vmatprep.subr.bf16.mxu0 %v2218
    %2451 = vmatpush1.bf16.msra.mxu0 %v2217
    %2452 = vmatprep.subr.bf16.mxu0 %v2222
    %2453 = vmatpush1.bf16.msra.mxu0 %v2221
    %2454 = vmatprep.subr.bf16.mxu0 %v2226
    %2455 = vmatpush1.bf16.msra.mxu0 %v2225
    %2456 = vmatprep.subr.bf16.mxu0 %v2230
    %2457 = vmatpush1.bf16.msra.mxu0 %v2229
    %2458 = vmatprep.subr.bf16.mxu0 %v2234
    %2459 = vmatpush1.bf16.msra.mxu0 %v2233
    %2460 = vmatprep.subr.bf16.mxu0 %v2238
    %2461 = vmatpush1.bf16.msra.mxu0 %v2237
    %2462 = vmatprep.subr.bf16.mxu0 %v2242
    %2463 = vmatpush1.bf16.msra.mxu0 %v2241
    %2464 = vmatprep.subr.bf16.mxu0 %v2246
    %2465 = vmatpush1.bf16.msra.mxu0 %v2245
    %2466 = vmatprep.subr.bf16.mxu0 %v2250
    %2467 = vmatpush1.bf16.msra.mxu0 %v2249
    %2468 = vmatprep.subr.bf16.mxu0 %v2254
    %2469 = vmatpush1.bf16.msra.mxu0 %v2253
    %2470 = vmatprep.subr.bf16.mxu0 %v2258
    %2471 = vmatpush1.bf16.msra.mxu0 %v2257
    %2472 = vmatprep.subr.bf16.mxu0 %v2262
    %2473 = vmatpush1.bf16.msra.mxu0 %v2261
    %2474 = vmatprep.subr.bf16.mxu0 %v2266
    %2475 = vmatpush1.bf16.msra.mxu0 %v2265
    %2476 = vmatprep.subr.bf16.mxu0 %v2270
    %2477 = vmatpush1.bf16.msra.mxu0 %v2269
    %2478 = vmatprep.subr.bf16.mxu0 %v2274
    %2479 = vmatpush1.bf16.msra.mxu0 %v2273
    %2480 = vmatprep.subr.bf16.mxu0 %v2278
    %2481 = vmatpush1.bf16.msra.mxu0 %v2277
    %2482 = vmatprep.mubr.bf16.mxu0 %v1640
    %2483 = vmatmul.mubr.bf16.gmra.mrb[0].mxu0 %v1639
    %v2484 = vpop.f32.mrb[0].mxu0
    %v2485 = vadd.f32 %v2444, %v2484
    %v2486 = vpop.f32.mrb[0].mxu0
    %v2487 = vadd.f32 %v2446, %v2486
    %v2488 = vpop.f32.mrb[0].mxu0
    %v2489 = vpop.f32.mrb[0].mxu0
    %2490 = vdwg.mxu0
    %2491 = vmatprep.subr.bf16.mxu0 %v2156
    %2492 = vmatpush1.bf16.msra.mxu0 %v2155
    %2493 = vmatprep.subr.bf16.mxu0 %v2160
    %2494 = vmatpush1.bf16.msra.mxu0 %v2159
    %2495 = vmatprep.subr.bf16.mxu0 %v2164
    %2496 = vmatpush1.bf16.msra.mxu0 %v2163
    %2497 = vmatprep.subr.bf16.mxu0 %v2168
    %2498 = vmatpush1.bf16.msra.mxu0 %v2167
    %2499 = vmatprep.subr.bf16.mxu0 %v2172
    %2500 = vmatpush1.bf16.msra.mxu0 %v2171
    %2501 = vmatprep.subr.bf16.mxu0 %v2176
    %2502 = vmatpush1.bf16.msra.mxu0 %v2175
    %2503 = vmatprep.subr.bf16.mxu0 %v2180
    %2504 = vmatpush1.bf16.msra.mxu0 %v2179
    %2505 = vmatprep.subr.bf16.mxu0 %v2184
    %2506 = vmatpush1.bf16.msra.mxu0 %v2183
    %2507 = vmatprep.subr.bf16.mxu0 %v2188
    %2508 = vmatpush1.bf16.msra.mxu0 %v2187
    %2509 = vmatprep.subr.bf16.mxu0 %v2192
    %2510 = vmatpush1.bf16.msra.mxu0 %v2191
    %2511 = vmatprep.subr.bf16.mxu0 %v2196
    %2512 = vmatpush1.bf16.msra.mxu0 %v2195
    %2513 = vmatprep.subr.bf16.mxu0 %v2200
    %2514 = vmatpush1.bf16.msra.mxu0 %v2199
    %2515 = vmatprep.subr.bf16.mxu0 %v2204
    %2516 = vmatpush1.bf16.msra.mxu0 %v2203
    %2517 = vmatprep.subr.bf16.mxu0 %v2208
    %2518 = vmatpush1.bf16.msra.mxu0 %v2207
    %2519 = vmatprep.subr.bf16.mxu0 %v2212
    %2520 = vmatpush1.bf16.msra.mxu0 %v2211
    %2521 = vmatprep.subr.bf16.mxu0 %v2216
    %2522 = vmatpush1.bf16.msra.mxu0 %v2215
    %2523 = vmatprep.mubr.bf16.mxu0 %v1638
    %2524 = vmatmul.mubr.bf16.gmra.mrb[0].mxu0 %v1637
    %v2525 = vpop.f32.mrb[0].mxu0
    %v2526 = vadd.f32 0.0, %v2525
    %v2527 = vpop.f32.mrb[0].mxu0
    %v2528 = vadd.f32 0.0, %v2527
    %v2529 = vpop.f32.mrb[0].mxu0
    %v2530 = vpop.f32.mrb[0].mxu0
    %2531 = vdwg.mxu0
    %2532 = vmatprep.subr.bf16.mxu0 %v2220
    %2533 = vmatpush1.bf16.msra.mxu0 %v2219
    %2534 = vmatprep.subr.bf16.mxu0 %v2224
    %2535 = vmatpush1.bf16.msra.mxu0 %v2223
    %2536 = vmatprep.subr.bf16.mxu0 %v2228
    %2537 = vmatpush1.bf16.msra.mxu0 %v2227
    %2538 = vmatprep.subr.bf16.mxu0 %v2232
    %2539 = vmatpush1.bf16.msra.mxu0 %v2231
    %2540 = vmatprep.subr.bf16.mxu0 %v2236
    %2541 = vmatpush1.bf16.msra.mxu0 %v2235
    %2542 = vmatprep.subr.bf16.mxu0 %v2240
    %2543 = vmatpush1.bf16.msra.mxu0 %v2239
    %2544 = vmatprep.subr.bf16.mxu0 %v2244
    %2545 = vmatpush1.bf16.msra.mxu0 %v2243
    %2546 = vmatprep.subr.bf16.mxu0 %v2248
    %2547 = vmatpush1.bf16.msra.mxu0 %v2247
    %2548 = vmatprep.subr.bf16.mxu0 %v2252
    %2549 = vmatpush1.bf16.msra.mxu0 %v2251
    %2550 = vmatprep.subr.bf16.mxu0 %v2256
    %2551 = vmatpush1.bf16.msra.mxu0 %v2255
    %2552 = vmatprep.subr.bf16.mxu0 %v2260
    %2553 = vmatpush1.bf16.msra.mxu0 %v2259
    %2554 = vmatprep.subr.bf16.mxu0 %v2264
    %2555 = vmatpush1.bf16.msra.mxu0 %v2263
    %2556 = vmatprep.subr.bf16.mxu0 %v2268
    %2557 = vmatpush1.bf16.msra.mxu0 %v2267
    %2558 = vmatprep.subr.bf16.mxu0 %v2272
    %2559 = vmatpush1.bf16.msra.mxu0 %v2271
    %2560 = vmatprep.subr.bf16.mxu0 %v2276
    %2561 = vmatpush1.bf16.msra.mxu0 %v2275
    %2562 = vmatprep.subr.bf16.mxu0 %v2280
    %2563 = vmatpush1.bf16.msra.mxu0 %v2279
    %2564 = vmatprep.mubr.bf16.mxu0 %v1640
    %2565 = vmatmul.mubr.bf16.gmra.mrb[0].mxu0 %v1639
    %v2566 = vpop.f32.mrb[0].mxu0
    %v2567 = vadd.f32 %v2526, %v2566
    %v2568 = vpop.f32.mrb[0].mxu0
    %v2569 = vadd.f32 %v2528, %v2568
    %v2570 = vpop.f32.mrb[0].mxu0
    %v2571 = vpop.f32.mrb[0].mxu0
    %2572 = vdwg.mxu0
    %s2573 = scalar_lea.vmem %s3, 1
    %v2574 = vld [vmem:[%s2573] ss:$2 sm:$0xff]
    %v2576 = vlaneseq
    %v2577 = vshrl.u32 %v2576, 7
    %v2578 = vsub.s32 0, %v2577
    %v2579 = vrot.slane %v2574, %v2578
    %v2580 = vlaneseq
    %v2581 = vshrl.u32 %v2580, 7
    %v2582 = vsub.s32 1, %v2581
    %v2583 = vrot.slane %v2574, %v2582
    %v2584 = vlaneseq
    %v2585 = vshrl.u32 %v2584, 7
    %v2586 = vsub.s32 2, %v2585
    %v2587 = vrot.slane %v2574, %v2586
    %v2588 = vlaneseq
    %v2589 = vshrl.u32 %v2588, 7
    %v2590 = vsub.s32 3, %v2589
    %v2591 = vrot.slane %v2574, %v2590
    %v2592 = vlaneseq
    %v2593 = vshrl.u32 %v2592, 7
    %v2594 = vsub.s32 4, %v2593
    %v2595 = vrot.slane %v2574, %v2594
    %v2596 = vlaneseq
    %v2597 = vshrl.u32 %v2596, 7
    %v2598 = vsub.s32 5, %v2597
    %v2599 = vrot.slane %v2574, %v2598
    %v2600 = vlaneseq
    %v2601 = vshrl.u32 %v2600, 7
    %v2602 = vsub.s32 6, %v2601
    %v2603 = vrot.slane %v2574, %v2602
    %v2604 = vlaneseq
    %v2605 = vshrl.u32 %v2604, 7
    %v2606 = vsub.s32 7, %v2605
    %v2607 = vrot.slane %v2574, %v2606
    %v2616 = vadd.f32 %v1549, %v2579
    %v2617 = vadd.f32 %v1551, %v2583
    %v2618 = vadd.f32 %v1631, %v2587
    %v2619 = vadd.f32 %v1633, %v2591
    %v2620 = vadd.f32 %v2485, %v2595
    %v2621 = vadd.f32 %v2487, %v2599
    %v2622 = vadd.f32 %v2567, %v2603
    %v2623 = vadd.f32 %v2569, %v2607
    %v2624 = vadd.f32 %v2616, 3.0
    %v2625 = vadd.f32 %v2617, 3.0
    %v2626 = vadd.f32 %v2618, 3.0
    %v2627 = vadd.f32 %v2619, 3.0
    %v2628 = vadd.f32 %v2620, 3.0
    %v2629 = vadd.f32 %v2621, 3.0
    %v2630 = vadd.f32 %v2622, 3.0
    %v2631 = vadd.f32 %v2623, 3.0
    %v2632 = vmax.f32 %v2624, 0.0
    %v2633 = vmax.f32 %v2625, 0.0
    %v2634 = vmax.f32 %v2626, 0.0
    %v2635 = vmax.f32 %v2627, 0.0
    %v2636 = vmax.f32 %v2628, 0.0
    %v2637 = vmax.f32 %v2629, 0.0
    %v2638 = vmax.f32 %v2630, 0.0
    %v2639 = vmax.f32 %v2631, 0.0
    %v2640 = vmin.f32 %v2632, 6.0
    %v2641 = vmin.f32 %v2633, 6.0
    %v2642 = vmin.f32 %v2634, 6.0
    %v2643 = vmin.f32 %v2635, 6.0
    %v2644 = vmin.f32 %v2636, 6.0
    %v2645 = vmin.f32 %v2637, 6.0
    %v2646 = vmin.f32 %v2638, 6.0
    %v2647 = vmin.f32 %v2639, 6.0
    %v2648 = vmul.f32 %v2616, %v2640
    %v2649 = vmul.f32 %v2617, %v2641
    %v2650 = vmul.f32 %v2618, %v2642
    %v2651 = vmul.f32 %v2619, %v2643
    %v2652 = vmul.f32 %v2620, %v2644
    %v2653 = vmul.f32 %v2621, %v2645
    %v2654 = vmul.f32 %v2622, %v2646
    %v2655 = vmul.f32 %v2623, %v2647
    %v2656 = vmul.f32 %v2648, 0.16666667
    %v2657 = vmul.f32 %v2649, 0.16666667
    %v2658 = vmul.f32 %v2650, 0.16666667
    %v2659 = vmul.f32 %v2651, 0.16666667
    %v2660 = vmul.f32 %v2652, 0.16666667
    %v2661 = vmul.f32 %v2653, 0.16666667
    %v2662 = vmul.f32 %v2654, 0.16666667
    %v2663 = vmul.f32 %v2655, 0.16666667
    %v2668 = vrot.slane %v2660, 6
    %v2669 = vrot.slane %v2661, 6
    %v2670 = vrot.slane %v2662, 6
    %v2671 = vrot.slane %v2663, 6
    %vm2676 = vcmask 1041408
    %v2677 = vsel %vm2676, %v2656, %v2668
    %v2678 = vsel %vm2676, %v2657, %v2669
    %v2679 = vsel %vm2676, %v2658, %v2670
    %v2680 = vsel %vm2676, %v2659, %v2671
    %v2681 = vpack.c.bf16 %v2677, %v2677
    %v2682 = vpack.c.bf16 %v2678, %v2678
    %v2683 = vpack.c.bf16 %v2679, %v2679
    %v2684 = vpack.c.bf16 %v2680, %v2680
    %v2685 = vld [vmem:[#allocation7] sm:$0xf]
    %v2686 = vld [vmem:[#allocation7 + $0x4] sm:$0xf]
    %v2687 = vld [vmem:[#allocation7 + $0x8] sm:$0xf]
    %v2688 = vld [vmem:[#allocation7 + $0xc] sm:$0xf]
    %v2689 = vld [vmem:[#allocation7 + $0x10] sm:$0xf]
    %v2690 = vld [vmem:[#allocation7 + $0x14] sm:$0xf]
    %v2691 = vld [vmem:[#allocation7 + $0x18] sm:$0xf]
    %v2692 = vld [vmem:[#allocation7 + $0x1c] sm:$0xf]
    %v2693 = vld [vmem:[#allocation7 + $0x20] sm:$0xf]
    %v2694 = vld [vmem:[#allocation7 + $0x24] sm:$0xf]
    %v2695 = vld [vmem:[#allocation7 + $0x28] sm:$0xf]
    %v2696 = vld [vmem:[#allocation7 + $0x2c] sm:$0xf]
    %v2697 = vld [vmem:[#allocation7 + $0x30] sm:$0xf]
    %v2698 = vld [vmem:[#allocation7 + $0x34] sm:$0xf]
    %v2699 = vld [vmem:[#allocation7 + $0x38] sm:$0xf]
    %v2700 = vld [vmem:[#allocation7 + $0x3c] sm:$0xf]
    %v2701 = vld [vmem:[#allocation7 + $0x40] sm:$0xf]
    %v2702 = vld [vmem:[#allocation7 + $0x44] sm:$0xf]
    %v2703 = vld [vmem:[#allocation7 + $0x48] sm:$0xf]
    %v2704 = vld [vmem:[#allocation7 + $0x4c] sm:$0xf]
    %v2705 = vld [vmem:[#allocation7 + $0x50] sm:$0xf]
    %v2706 = vld [vmem:[#allocation7 + $0x54] sm:$0xf]
    %v2707 = vld [vmem:[#allocation7 + $0x58] sm:$0xf]
    %v2708 = vld [vmem:[#allocation7 + $0x5c] sm:$0xf]
    %v2709 = vld [vmem:[#allocation7 + $0x60] sm:$0xf]
    %v2710 = vld [vmem:[#allocation7 + $0x64] sm:$0xf]
    %v2711 = vld [vmem:[#allocation7 + $0x68] sm:$0xf]
    %v2712 = vld [vmem:[#allocation7 + $0x6c] sm:$0xf]
    %v2713 = vld [vmem:[#allocation7 + $0x70] sm:$0xf]
    %v2714 = vld [vmem:[#allocation7 + $0x74] sm:$0xf]
    %v2715 = vld [vmem:[#allocation7 + $0x78] sm:$0xf]
    %v2716 = vld [vmem:[#allocation7 + $0x7c] sm:$0xf]
    %v2717 = vld [vmem:[#allocation7 + $0x80] sm:$0xf]
    %v2718 = vld [vmem:[#allocation7 + $0x84] sm:$0xf]
    %v2719 = vld [vmem:[#allocation7 + $0x88] sm:$0xf]
    %v2720 = vld [vmem:[#allocation7 + $0x8c] sm:$0xf]
    %v2721 = vld [vmem:[#allocation7 + $0x90] sm:$0xf]
    %v2722 = vld [vmem:[#allocation7 + $0x94] sm:$0xf]
    %v2723 = vld [vmem:[#allocation7 + $0x98] sm:$0xf]
    %v2724 = vld [vmem:[#allocation7 + $0x9c] sm:$0xf]
    %v2725 = vld [vmem:[#allocation7 + $0xa0] sm:$0xf]
    %v2726 = vld [vmem:[#allocation7 + $0xa4] sm:$0xf]
    %v2727 = vld [vmem:[#allocation7 + $0xa8] sm:$0xf]
    %v2728 = vld [vmem:[#allocation7 + $0xac] sm:$0xf]
    %v2729 = vld [vmem:[#allocation7 + $0xb0] sm:$0xf]
    %v2730 = vld [vmem:[#allocation7 + $0xb4] sm:$0xf]
    %v2731 = vld [vmem:[#allocation7 + $0xb8] sm:$0xf]
    %v2732 = vld [vmem:[#allocation7 + $0xbc] sm:$0xf]
    %v2733 = vld [vmem:[#allocation7 + $0xc0] sm:$0xf]
    %v2734 = vld [vmem:[#allocation7 + $0xc4] sm:$0xf]
    %v2735 = vld [vmem:[#allocation7 + $0xc8] sm:$0xf]
    %v2736 = vld [vmem:[#allocation7 + $0xcc] sm:$0xf]
    %v2737 = vld [vmem:[#allocation7 + $0xd0] sm:$0xf]
    %v2738 = vld [vmem:[#allocation7 + $0xd4] sm:$0xf]
    %v2739 = vld [vmem:[#allocation7 + $0xd8] sm:$0xf]
    %v2740 = vld [vmem:[#allocation7 + $0xdc] sm:$0xf]
    %v2741 = vld [vmem:[#allocation7 + $0xe0] sm:$0xf]
    %v2742 = vld [vmem:[#allocation7 + $0xe4] sm:$0xf]
    %v2743 = vld [vmem:[#allocation7 + $0xe8] sm:$0xf]
    %v2744 = vld [vmem:[#allocation7 + $0xec] sm:$0xf]
    %v2745 = vld [vmem:[#allocation7 + $0xf0] sm:$0xf]
    %v2746 = vld [vmem:[#allocation7 + $0xf4] sm:$0xf]
    %v2747 = vld [vmem:[#allocation7 + $0xf8] sm:$0xf]
    %v2748 = vld [vmem:[#allocation7 + $0xfc] sm:$0xf]
    %v2749 = vld [vmem:[%s6] sm:$0x1]
    %v2750 = vlaneseq
    %v2751 = vshrl.u32 %v2750, 7
    %v2752 = vsub.s32 0, %v2751
    %v2753 = vrot.slane %v2749, %v2752
    %v2818 = vunpack.c.l.b16 %v2685
    %v2819 = vunpack.c.l.b16 %v2686
    %v2820 = vunpack.c.l.b16 %v2687
    %v2821 = vunpack.c.l.b16 %v2688
    %v2822 = vunpack.c.l.b16 %v2689
    %v2823 = vunpack.c.l.b16 %v2690
    %v2824 = vunpack.c.l.b16 %v2691
    %v2825 = vunpack.c.l.b16 %v2692
    %v2826 = vunpack.c.l.b16 %v2693
    %v2827 = vunpack.c.l.b16 %v2694
    %v2828 = vunpack.c.l.b16 %v2695
    %v2829 = vunpack.c.l.b16 %v2696
    %v2830 = vunpack.c.l.b16 %v2697
    %v2831 = vunpack.c.l.b16 %v2698
    %v2832 = vunpack.c.l.b16 %v2699
    %v2833 = vunpack.c.l.b16 %v2700
    %v2834 = vunpack.c.l.b16 %v2701
    %v2835 = vunpack.c.l.b16 %v2702
    %v2836 = vunpack.c.l.b16 %v2703
    %v2837 = vunpack.c.l.b16 %v2704
    %v2838 = vunpack.c.l.b16 %v2705
    %v2839 = vunpack.c.l.b16 %v2706
    %v2840 = vunpack.c.l.b16 %v2707
    %v2841 = vunpack.c.l.b16 %v2708
    %v2842 = vunpack.c.l.b16 %v2709
    %v2843 = vunpack.c.l.b16 %v2710
    %v2844 = vunpack.c.l.b16 %v2711
    %v2845 = vunpack.c.l.b16 %v2712
    %v2846 = vunpack.c.l.b16 %v2713
    %v2847 = vunpack.c.l.b16 %v2714
    %v2848 = vunpack.c.l.b16 %v2715
    %v2849 = vunpack.c.l.b16 %v2716
    %v2850 = vunpack.c.l.b16 %v2717
    %v2851 = vunpack.c.l.b16 %v2718
    %v2852 = vunpack.c.l.b16 %v2719
    %v2853 = vunpack.c.l.b16 %v2720
    %v2854 = vunpack.c.l.b16 %v2721
    %v2855 = vunpack.c.l.b16 %v2722
    %v2856 = vunpack.c.l.b16 %v2723
    %v2857 = vunpack.c.l.b16 %v2724
    %v2858 = vunpack.c.l.b16 %v2725
    %v2859 = vunpack.c.l.b16 %v2726
    %v2860 = vunpack.c.l.b16 %v2727
    %v2861 = vunpack.c.l.b16 %v2728
    %v2862 = vunpack.c.l.b16 %v2729
    %v2863 = vunpack.c.l.b16 %v2730
    %v2864 = vunpack.c.l.b16 %v2731
    %v2865 = vunpack.c.l.b16 %v2732
    %v2866 = vunpack.c.l.b16 %v2733
    %v2867 = vunpack.c.l.b16 %v2734
    %v2868 = vunpack.c.l.b16 %v2735
    %v2869 = vunpack.c.l.b16 %v2736
    %v2870 = vunpack.c.l.b16 %v2737
    %v2871 = vunpack.c.l.b16 %v2738
    %v2872 = vunpack.c.l.b16 %v2739
    %v2873 = vunpack.c.l.b16 %v2740
    %v2874 = vunpack.c.l.b16 %v2741
    %v2875 = vunpack.c.l.b16 %v2742
    %v2876 = vunpack.c.l.b16 %v2743
    %v2877 = vunpack.c.l.b16 %v2744
    %v2878 = vunpack.c.l.b16 %v2745
    %v2879 = vunpack.c.l.b16 %v2746
    %v2880 = vunpack.c.l.b16 %v2747
    %v2881 = vunpack.c.l.b16 %v2748
    %v2882 = vpack.c.b16 %v2819, %v2818
    %v2883 = vpack.c.b16 %v2821, %v2820
    %v2884 = vpack.c.b16 %v2823, %v2822
    %v2885 = vpack.c.b16 %v2825, %v2824
    %v2886 = vpack.c.b16 %v2827, %v2826
    %v2887 = vpack.c.b16 %v2829, %v2828
    %v2888 = vpack.c.b16 %v2831, %v2830
    %v2889 = vpack.c.b16 %v2833, %v2832
    %v2890 = vpack.c.b16 %v2835, %v2834
    %v2891 = vpack.c.b16 %v2837, %v2836
    %v2892 = vpack.c.b16 %v2839, %v2838
    %v2893 = vpack.c.b16 %v2841, %v2840
    %v2894 = vpack.c.b16 %v2843, %v2842
    %v2895 = vpack.c.b16 %v2845, %v2844
    %v2896 = vpack.c.b16 %v2847, %v2846
    %v2897 = vpack.c.b16 %v2849, %v2848
    %v2898 = vpack.c.b16 %v2851, %v2850
    %v2899 = vpack.c.b16 %v2853, %v2852
    %v2900 = vpack.c.b16 %v2855, %v2854
    %v2901 = vpack.c.b16 %v2857, %v2856
    %v2902 = vpack.c.b16 %v2859, %v2858
    %v2903 = vpack.c.b16 %v2861, %v2860
    %v2904 = vpack.c.b16 %v2863, %v2862
    %v2905 = vpack.c.b16 %v2865, %v2864
    %v2906 = vpack.c.b16 %v2867, %v2866
    %v2907 = vpack.c.b16 %v2869, %v2868
    %v2908 = vpack.c.b16 %v2871, %v2870
    %v2909 = vpack.c.b16 %v2873, %v2872
    %v2910 = vpack.c.b16 %v2875, %v2874
    %v2911 = vpack.c.b16 %v2877, %v2876
    %v2912 = vpack.c.b16 %v2879, %v2878
    %v2913 = vpack.c.b16 %v2881, %v2880
    %2946 = vmatprep.subr.bf16.mxu0 0
    %2947 = vmatpush1.bf16.msra.mxu0 %v2882
    %2948 = vmatprep.subr.bf16.mxu0 0
    %2949 = vmatpush1.bf16.msra.mxu0 %v2883
    %2950 = vmatprep.subr.bf16.mxu0 0
    %2951 = vmatpush1.bf16.msra.mxu0 %v2884
    %2952 = vmatprep.subr.bf16.mxu0 0
    %2953 = vmatpush1.bf16.msra.mxu0 %v2885
    %2954 = vmatprep.subr.bf16.mxu0 0
    %2955 = vmatpush1.bf16.msra.mxu0 %v2886
    %2956 = vmatprep.subr.bf16.mxu0 0
    %2957 = vmatpush1.bf16.msra.mxu0 %v2887
    %2958 = vmatprep.subr.bf16.mxu0 0
    %2959 = vmatpush1.bf16.msra.mxu0 %v2888
    %2960 = vmatprep.subr.bf16.mxu0 0
    %2961 = vmatpush1.bf16.msra.mxu0 %v2889
    %2962 = vmatprep.subr.bf16.mxu0 0
    %2963 = vmatpush1.bf16.msra.mxu0 %v2890
    %2964 = vmatprep.subr.bf16.mxu0 0
    %2965 = vmatpush1.bf16.msra.mxu0 %v2891
    %2966 = vmatprep.subr.bf16.mxu0 0
    %2967 = vmatpush1.bf16.msra.mxu0 %v2892
    %2968 = vmatprep.subr.bf16.mxu0 0
    %2969 = vmatpush1.bf16.msra.mxu0 %v2893
    %2970 = vmatprep.subr.bf16.mxu0 0
    %2971 = vmatpush1.bf16.msra.mxu0 %v2894
    %2972 = vmatprep.subr.bf16.mxu0 0
    %2973 = vmatpush1.bf16.msra.mxu0 %v2895
    %2974 = vmatprep.subr.bf16.mxu0 0
    %2975 = vmatpush1.bf16.msra.mxu0 %v2896
    %2976 = vmatprep.subr.bf16.mxu0 0
    %2977 = vmatpush1.bf16.msra.mxu0 %v2897
    %2978 = vmatprep.mubr.bf16.mxu0 %v2682
    %2979 = vmatmul.mubr.bf16.gmra.mrb[0].mxu0 %v2681
    %v2980 = vpop.f32.mrb[0].mxu0
    %v2981 = vadd.f32 %v2753, %v2980
    %v2982 = vpop.f32.mrb[0].mxu0
    %v2983 = vpop.f32.mrb[0].mxu0
    %v2984 = vpop.f32.mrb[0].mxu0
    %2985 = vdwg.mxu0
    %2986 = vmatprep.subr.bf16.mxu0 0
    %2987 = vmatpush1.bf16.msra.mxu0 %v2898
    %2988 = vmatprep.subr.bf16.mxu0 0
    %2989 = vmatpush1.bf16.msra.mxu0 %v2899
    %2990 = vmatprep.subr.bf16.mxu0 0
    %2991 = vmatpush1.bf16.msra.mxu0 %v2900
    %2992 = vmatprep.subr.bf16.mxu0 0
    %2993 = vmatpush1.bf16.msra.mxu0 %v2901
    %2994 = vmatprep.subr.bf16.mxu0 0
    %2995 = vmatpush1.bf16.msra.mxu0 %v2902
    %2996 = vmatprep.subr.bf16.mxu0 0
    %2997 = vmatpush1.bf16.msra.mxu0 %v2903
    %2998 = vmatprep.subr.bf16.mxu0 0
    %2999 = vmatpush1.bf16.msra.mxu0 %v2904
    %3000 = vmatprep.subr.bf16.mxu0 0
    %3001 = vmatpush1.bf16.msra.mxu0 %v2905
    %3002 = vmatprep.subr.bf16.mxu0 0
    %3003 = vmatpush1.bf16.msra.mxu0 %v2906
    %3004 = vmatprep.subr.bf16.mxu0 0
    %3005 = vmatpush1.bf16.msra.mxu0 %v2907
    %3006 = vmatprep.subr.bf16.mxu0 0
    %3007 = vmatpush1.bf16.msra.mxu0 %v2908
    %3008 = vmatprep.subr.bf16.mxu0 0
    %3009 = vmatpush1.bf16.msra.mxu0 %v2909
    %3010 = vmatprep.subr.bf16.mxu0 0
    %3011 = vmatpush1.bf16.msra.mxu0 %v2910
    %3012 = vmatprep.subr.bf16.mxu0 0
    %3013 = vmatpush1.bf16.msra.mxu0 %v2911
    %3014 = vmatprep.subr.bf16.mxu0 0
    %3015 = vmatpush1.bf16.msra.mxu0 %v2912
    %3016 = vmatprep.subr.bf16.mxu0 0
    %3017 = vmatpush1.bf16.msra.mxu0 %v2913
    %3018 = vmatprep.mubr.bf16.mxu0 %v2684
    %3019 = vmatmul.mubr.bf16.gmra.mrb[0].mxu0 %v2683
    %v3020 = vpop.f32.mrb[0].mxu0
    %v3021 = vadd.f32 %v2981, %v3020
    %v3022 = vpop.f32.mrb[0].mxu0
    %v3023 = vpop.f32.mrb[0].mxu0
    %v3024 = vpop.f32.mrb[0].mxu0
    %3025 = vdwg.mxu0
    %v3026 = vadd.f32 %v3021, 3.0
    %v3027 = vmax.f32 %v3026, 0.0
    %v3028 = vmin.f32 %v3027, 6.0
    %v3029 = vmul.f32 %v3021, %v3028
    %v3030 = vmul.f32 %v3029, 0.16666667
    %v3031 = vpack.c.bf16 %v3030, %v3030
    %v3032 = vld [vmem:[%s5] sm:$0xf]
    %v3033 = vld [vmem:[%s5 + $0x4] sm:$0xf]
    %v3034 = vld [vmem:[%s5 + $0x8] sm:$0xf]
    %v3035 = vld [vmem:[%s5 + $0xc] sm:$0xf]
    %v3036 = vld [vmem:[%s5 + $0x10] sm:$0xf]
    %v3037 = vld [vmem:[%s5 + $0x14] sm:$0xf]
    %v3038 = vld [vmem:[%s5 + $0x18] sm:$0xf]
    %v3039 = vld [vmem:[%s5 + $0x1c] sm:$0xf]
    %v3040 = vld [vmem:[%s5 + $0x20] sm:$0xf]
    %v3041 = vld [vmem:[%s5 + $0x24] sm:$0xf]
    %v3042 = vld [vmem:[%s5 + $0x28] sm:$0xf]
    %v3043 = vld [vmem:[%s5 + $0x2c] sm:$0xf]
    %v3044 = vld [vmem:[%s5 + $0x30] sm:$0xf]
    %v3045 = vld [vmem:[%s5 + $0x34] sm:$0xf]
    %v3046 = vld [vmem:[%s5 + $0x38] sm:$0xf]
    %v3047 = vld [vmem:[%s5 + $0x3c] sm:$0xf]
    %v3048 = vld [vmem:[%s6 + $0x1] sm:$0x1]
    %v3049 = vlaneseq
    %v3050 = vshrl.u32 %v3049, 7
    %v3051 = vsub.s32 0, %v3050
    %v3052 = vrot.slane %v3048, %v3051
    %v3069 = vunpack.c.l.b16 %v3032
    %v3070 = vunpack.c.l.b16 %v3033
    %v3071 = vunpack.c.l.b16 %v3034
    %v3072 = vunpack.c.l.b16 %v3035
    %v3073 = vunpack.c.l.b16 %v3036
    %v3074 = vunpack.c.l.b16 %v3037
    %v3075 = vunpack.c.l.b16 %v3038
    %v3076 = vunpack.c.l.b16 %v3039
    %v3077 = vunpack.c.l.b16 %v3040
    %v3078 = vunpack.c.l.b16 %v3041
    %v3079 = vunpack.c.l.b16 %v3042
    %v3080 = vunpack.c.l.b16 %v3043
    %v3081 = vunpack.c.l.b16 %v3044
    %v3082 = vunpack.c.l.b16 %v3045
    %v3083 = vunpack.c.l.b16 %v3046
    %v3084 = vunpack.c.l.b16 %v3047
    %v3085 = vpack.c.b16 %v3070, %v3069
    %v3086 = vpack.c.b16 %v3072, %v3071
    %v3087 = vpack.c.b16 %v3074, %v3073
    %v3088 = vpack.c.b16 %v3076, %v3075
    %v3089 = vpack.c.b16 %v3078, %v3077
    %v3090 = vpack.c.b16 %v3080, %v3079
    %v3091 = vpack.c.b16 %v3082, %v3081
    %v3092 = vpack.c.b16 %v3084, %v3083
    %3101 = vmatprep.subr.bf16.mxu0 0
    %3102 = vmatpush1.bf16.msra.mxu0 %v3085
    %3103 = vmatprep.subr.bf16.mxu0 0
    %3104 = vmatpush1.bf16.msra.mxu0 %v3086
    %3105 = vmatprep.subr.bf16.mxu0 0
    %3106 = vmatpush1.bf16.msra.mxu0 %v3087
    %3107 = vmatprep.subr.bf16.mxu0 0
    %3108 = vmatpush1.bf16.msra.mxu0 %v3088
    %3109 = vmatprep.subr.bf16.mxu0 0
    %3110 = vmatpush1.bf16.msra.mxu0 %v3089
    %3111 = vmatprep.subr.bf16.mxu0 0
    %3112 = vmatpush1.bf16.msra.mxu0 %v3090
    %3113 = vmatprep.subr.bf16.mxu0 0
    %3114 = vmatpush1.bf16.msra.mxu0 %v3091
    %3115 = vmatprep.subr.bf16.mxu0 0
    %3116 = vmatpush1.bf16.msra.mxu0 %v3092
    %3117 = vmatprep.subr.bf16.mxu0 0
    %3118 = vmatpush1.bf16.msra.mxu0 0
    %3119 = vmatprep.subr.bf16.mxu0 0
    %3120 = vmatpush1.bf16.msra.mxu0 0
    %3121 = vmatprep.subr.bf16.mxu0 0
    %3122 = vmatpush1.bf16.msra.mxu0 0
    %3123 = vmatprep.subr.bf16.mxu0 0
    %3124 = vmatpush1.bf16.msra.mxu0 0
    %3125 = vmatprep.subr.bf16.mxu0 0
    %3126 = vmatpush1.bf16.msra.mxu0 0
    %3127 = vmatprep.subr.bf16.mxu0 0
    %3128 = vmatpush1.bf16.msra.mxu0 0
    %3129 = vmatprep.subr.bf16.mxu0 0
    %3130 = vmatpush1.bf16.msra.mxu0 0
    %3131 = vmatprep.subr.bf16.mxu0 0
    %3132 = vmatpush1.bf16.msra.mxu0 0
    %3133 = vmatprep.mubr.bf16.mxu0 0
    %3134 = vmatmul.mubr.bf16.gmra.mrb[0].mxu0 %v3031
    %v3135 = vpop.f32.mrb[0].mxu0
    %v3136 = vadd.f32 %v3052, %v3135
    %v3137 = vpop.f32.mrb[0].mxu0
    %v3138 = vpop.f32.mrb[0].mxu0
    %v3139 = vpop.f32.mrb[0].mxu0
    %3140 = vdwg.mxu0
    %v3141 = vadd.f32 %v3136, 3.0
    %v3142 = vmax.f32 %v3141, 0.0
    %v3143 = vmin.f32 %v3142, 6.0
    %v3144 = vmul.f32 %v3136, %v3143
    %v3145 = vmul.f32 %v3144, 0.16666667
    %v3146 = vpack.c.bf16 %v3145, %v3145
    %v3147 = vld [vmem:[%s5 + $0x40] sm:$0xf]
    %v3148 = vld [vmem:[%s5 + $0x44] sm:$0xf]
    %v3149 = vld [vmem:[%s5 + $0x48] sm:$0xf]
    %v3150 = vld [vmem:[%s5 + $0x4c] sm:$0xf]
    %v3151 = vld [vmem:[%s5 + $0x50] sm:$0xf]
    %v3152 = vld [vmem:[%s5 + $0x54] sm:$0xf]
    %v3153 = vld [vmem:[%s5 + $0x58] sm:$0xf]
    %v3154 = vld [vmem:[%s5 + $0x5c] sm:$0xf]
    %v3155 = vld [vmem:[%s6 + $0x2] sm:$0x1]
    %v3156 = vlaneseq
    %v3157 = vshrl.u32 %v3156, 7
    %v3158 = vsub.s32 0, %v3157
    %v3159 = vrot.slane %v3155, %v3158
    %v3168 = vunpack.c.l.b16 %v3147
    %v3169 = vunpack.c.l.b16 %v3148
    %v3170 = vunpack.c.l.b16 %v3149
    %v3171 = vunpack.c.l.b16 %v3150
    %v3172 = vunpack.c.l.b16 %v3151
    %v3173 = vunpack.c.l.b16 %v3152
    %v3174 = vunpack.c.l.b16 %v3153
    %v3175 = vunpack.c.l.b16 %v3154
    %v3176 = vpack.c.b16 %v3169, %v3168
    %v3177 = vpack.c.b16 %v3171, %v3170
    %v3178 = vpack.c.b16 %v3173, %v3172
    %v3179 = vpack.c.b16 %v3175, %v3174
    %vm3184 = vcmask 523264
    %v3186 = vsel %vm3184, %v3146, 0
    %3188 = vmatprep.subr.bf16.mxu0 0
    %3189 = vmatpush1.bf16.msra.mxu0 %v3176
    %3190 = vmatprep.subr.bf16.mxu0 0
    %3191 = vmatpush1.bf16.msra.mxu0 %v3177
    %3192 = vmatprep.subr.bf16.mxu0 0
    %3193 = vmatpush1.bf16.msra.mxu0 %v3178
    %3194 = vmatprep.subr.bf16.mxu0 0
    %3195 = vmatpush1.bf16.msra.mxu0 %v3179
    %3196 = vmatprep.subr.bf16.mxu0 0
    %3197 = vmatpush1.bf16.msra.mxu0 0
    %3198 = vmatprep.subr.bf16.mxu0 0
    %3199 = vmatpush1.bf16.msra.mxu0 0
    %3200 = vmatprep.subr.bf16.mxu0 0
    %3201 = vmatpush1.bf16.msra.mxu0 0
    %3202 = vmatprep.subr.bf16.mxu0 0
    %3203 = vmatpush1.bf16.msra.mxu0 0
    %3204 = vmatprep.subr.bf16.mxu0 0
    %3205 = vmatpush1.bf16.msra.mxu0 0
    %3206 = vmatprep.subr.bf16.mxu0 0
    %3207 = vmatpush1.bf16.msra.mxu0 0
    %3208 = vmatprep.subr.bf16.mxu0 0
    %3209 = vmatpush1.bf16.msra.mxu0 0
    %3210 = vmatprep.subr.bf16.mxu0 0
    %3211 = vmatpush1.bf16.msra.mxu0 0
    %3212 = vmatprep.subr.bf16.mxu0 0
    %3213 = vmatpush1.bf16.msra.mxu0 0
    %3214 = vmatprep.subr.bf16.mxu0 0
    %3215 = vmatpush1.bf16.msra.mxu0 0
    %3216 = vmatprep.subr.bf16.mxu0 0
    %3217 = vmatpush1.bf16.msra.mxu0 0
    %3218 = vmatprep.subr.bf16.mxu0 0
    %3219 = vmatpush1.bf16.msra.mxu0 0
    %3220 = vmatprep.mubr.bf16.mxu0 0
    %3221 = vmatmul.mubr.bf16.gmra.mrb[0].mxu0 %v3186
    %v3222 = vpop.f32.mrb[0].mxu0
    %v3223 = vadd.f32 %v3159, %v3222
    %v3224 = vpop.f32.mrb[0].mxu0
    %v3225 = vpop.f32.mrb[0].mxu0
    %v3226 = vpop.f32.mrb[0].mxu0
    %3227 = vdwg.mxu0
    %v3229 = vrot.slane %v3223, 2
    %v3231 = vadd.f32 %v3223, %v3229
    %v3232 = vmul.f32 %v3231, 0.5
    %vm3233 = vcmask 25600
    %3234 = vst.msk [vmem:[#allocation8] sm:$0x3] %vm3233, %v3232
    // Predicated region
    $region42: #{tpu_custom_call.1} parent=1 // pred_check
      _
    $region43: #{tpu_custom_call.1} parent=1 // pred_check_branch
      %3236 = sbr.rel (0) target = $region45
    $region44: #{tpu_custom_call.1} parent=1 // pred_region
      %s3238 = ssub.s32 32, 32
      %3239 = vsyncadd [#allocation4], %s3238
      %s3241 = sshll.u32 [#allocation8], 4
      %s3242 = int_to_ptr.vmem [resolvable:$true] %s3241
      %3244 = dma.vmem_to_hbm [thread:$0]  %s3242, 32, %s7, [#allocation4]
    $region45: #{tpu_custom_call.1} parent=1 // pred_fallthru
      _
    // Predicated region
    $region46: #{tpu_custom_call.1} parent=1 // pred_check
      _
    $region47: #{tpu_custom_call.1} parent=1 // pred_check_branch
      %3246 = sbr.rel (0) target = $region49
    $region48: #{tpu_custom_call.1} parent=1 // pred_region
      %3247 = dma.done [#allocation4], 32
    $region49: #{tpu_custom_call.1} parent=1 // pred_fallthru
      _
    %3248 = vsyncpa [#allocation3], 1
    %3249 = vsyncpa [#allocation6], 1
    %3250 = vsyncpa [#allocation4], 1

</llo_original>
